<compile_context>
chip_gen: v5e
topology: v5e:2x2
jax: 0.10.0
libtpu: 0.0.40
codegen_flags: <defaults>
</compile_context>

<pallas_src>
import functools
import math

import jax
import jax.numpy as jnp
from jax.experimental import pallas as pl
from jax.experimental.pallas import tpu as pltpu


def _rup(n, m):
    return ((n + m - 1) // m) * m


def _pick_tile(n, align, target):
    """Largest multiple of `align` that divides n and is <= max(target, align)."""
    t = min(n, max((target // align) * align, align))
    while n % t:
        t -= align
    return t


def _vmem_limit(entries):
    """Scoped-VMEM budget from the per-invocation footprint.

    2x for double-buffered blocks + margin; floored near the default scoped
    limit and capped at v7x's 64 MiB physical VMEM so the budget is valid on
    every generation (beyond that, re-tile instead of raising the limit).
    """
    total = 0
    for shape, dtype in entries:
        total += math.prod(shape) * jnp.dtype(dtype).itemsize
    return min(max(2 * total + (4 << 20), 16 << 20), 64 << 20)


# --------------------------------------------------------------------------- #
# Stage 1: fused batched input projection + serial GRU recurrence
# --------------------------------------------------------------------------- #
def _gru_kernel(x_ref, h0_ref, wih_ref, whh_ref, gib_ref, bhn_ref,
                hall_ref, hlast_ref, gi_ref):
    """One batch block of the GRU recurrence.

    x_ref    : (T, Bb, Ep)   bf16  time-major, batch block (Bb % 8 == 0)
    h0_ref   : (Bb, Hp)      f32
    wih_ref  : (Ep, 3*Hp)    bf16  gate-packed [r | z | n], each gate Hp lanes
    whh_ref  : (Hp, 3*Hp)    f32
    gib_ref  : (1, 3*Hp)     f32   b_ih + [b_hr | b_hz | 0]  (r/z biases folded)
    bhn_ref  : (1, Hp)       f32   b_hn (must stay inside r * (...))
    hall_ref : (T, Bb, Hp)   bf16  OUT: all hidden states (consumed by FC stage)
    hlast_ref: (Bb, Hp)      f32   OUT: final hidden state
    gi_ref   : (T*Bb, 3*Hp)  f32   scratch: batched input projections
    """
    t_steps, bb, ep = x_ref.shape
    hp = h0_ref.shape[1]

    # (1) ONE bf16 MXU matmul (f32 accum) for all T steps' input projections;
    #     b_ih and the r/z hidden biases are pre-folded into gib.
    x2 = x_ref[...].reshape(t_steps * bb, ep)
    gi_ref[...] = (
        jnp.dot(x2, wih_ref[...], preferred_element_type=jnp.float32)
        + gib_ref[...]
    )

    whh = whh_ref[...]
    bhn = jnp.broadcast_to(bhn_ref[...], (bb, hp))   # hoisted out of the loop

    # (2) Serial recurrence: only h @ Whh + elementwise gate math on the
    #     critical path.  Gate blocks are 128-lane padded, so every slice
    #     below is whole vregs (no lane selects / masked stores in the loop).
    # TODO(synk): weight-stationary MXU path (pltpu.matmul_push_rhs(Whh) once,
    # matmul_acc_lhs/matmul_pop per step) to avoid re-pushing the same RHS.
    def step(t, h_prev):
        off = pl.multiple_of(t * bb, 8)
        gi = gi_ref[pl.ds(off, bb), :]                               # (Bb, 3Hp)
        gh = jnp.dot(h_prev, whh, preferred_element_type=jnp.float32)
        r = jax.nn.sigmoid(gi[:, :hp] + gh[:, :hp])
        z = jax.nn.sigmoid(gi[:, hp:2 * hp] + gh[:, hp:2 * hp])
        n = jnp.tanh(gi[:, 2 * hp:] + r * (gh[:, 2 * hp:] + bhn))
        h_new = (1.0 - z) * n + z * h_prev
        hall_ref[t] = h_new.astype(hall_ref.dtype)
        return h_new

    # Bounded unroll: consecutive steps are data-dependent, so a small unroll
    # gives the useful overlap (t's gate math with t+1's gi load) without
    # instruction-stream / vreg-pressure blow-up at large T.
    unroll = t_steps if t_steps <= 8 else 8
    h_fin = jax.lax.fori_loop(0, t_steps, step, h0_ref[...], unroll=unroll)
    hlast_ref[...] = h_fin                           # written once, after loop


# --------------------------------------------------------------------------- #
# Stage 2: deferred FC / vocab projection, tiled over (rows, vocab)
# --------------------------------------------------------------------------- #
def _fc_kernel(h_ref, w_ref, b_ref, o_ref):
    o_ref[...] = (
        jnp.dot(h_ref[...], w_ref[...], preferred_element_type=jnp.float32)
        + b_ref[...]
    )


@functools.partial(jax.jit,
                   static_argnames=("dec_units", "vocab_size", "batch_blocks"))
def decoder_forward(x_ids, h0, params, *, dec_units, vocab_size,
                    batch_blocks=1):
    """x_ids: (B, T) int32 token ids.  h0: (1, B, H).

    Returns (logits (B, T, V), state (1, B, H), None), matching the PyTorch
    module's forward (batch_first GRU, num_layers=1).
    """
    emb = params["embedding"]   # (V, Ep)   f32, column-padded
    wih = params["wih"]         # (Ep, 3Hp) bf16, gate blocks of Hp lanes
    whh = params["whh"]         # (Hp, 3Hp) f32
    gib = params["gi_bias"]     # (1, 3Hp)  f32   b_ih + [b_hr | b_hz | 0]
    bhn = params["bhh_n"]       # (1, Hp)   f32
    wfc = params["wfc"]         # (Hp, Vp)  bf16
    bfc = params["bfc"]         # (1, Vp)   f32

    H, V = dec_units, vocab_size
    B, T = x_ids.shape
    Ep = emb.shape[1]
    Hp = whh.shape[0]
    Vp = wfc.shape[1]
    Bp = _rup(B, 8)

    assert Bp % batch_blocks == 0 and (Bp // batch_blocks) % 8 == 0
    bblk = Bp // batch_blocks

    # Embedding gather stays in plain JAX glue, straight into the time-major
    # padded layout the kernel consumes; cast to bf16 for the input projection.
    ids = jnp.pad(jnp.transpose(x_ids), ((0, 0), (0, Bp - B)))       # (T, Bp)
    x3 = jnp.take(emb, ids, axis=0).astype(jnp.bfloat16)             # (T, Bp, Ep)

    h0p = jnp.pad(h0[0].astype(jnp.float32),
                  ((0, Bp - B), (0, Hp - H)))                        # (Bp, Hp)

    # ---- Stage 1: GRU recurrence (grid over independent batch blocks) ------
    vmem1 = _vmem_limit([
        ((T, bblk, Ep), jnp.bfloat16), ((bblk, Hp), jnp.float32),
        ((Ep, 3 * Hp), jnp.bfloat16), ((Hp, 3 * Hp), jnp.float32),
        ((1, 3 * Hp), jnp.float32), ((1, Hp), jnp.float32),
        ((T, bblk, Hp), jnp.bfloat16), ((bblk, Hp), jnp.float32),
        ((T * bblk, 3 * Hp), jnp.float32),
    ])
    hall, hlast = pl.pallas_call(
        _gru_kernel,
        out_shape=(
            jax.ShapeDtypeStruct((T, Bp, Hp), jnp.bfloat16),
            jax.ShapeDtypeStruct((Bp, Hp), jnp.float32),
        ),
        grid=(batch_blocks,),
        in_specs=[
            pl.BlockSpec((T, bblk, Ep), lambda b: (0, b, 0)),
            pl.BlockSpec((bblk, Hp), lambda b: (b, 0)),
            pl.BlockSpec((Ep, 3 * Hp), lambda b: (0, 0)),
            pl.BlockSpec((Hp, 3 * Hp), lambda b: (0, 0)),
            pl.BlockSpec((1, 3 * Hp), lambda b: (0, 0)),
            pl.BlockSpec((1, Hp), lambda b: (0, 0)),
        ],
        out_specs=(
            pl.BlockSpec((T, bblk, Hp), lambda b: (0, b, 0)),
            pl.BlockSpec((bblk, Hp), lambda b: (b, 0)),
        ),
        scratch_shapes=[pltpu.VMEM((T * bblk, 3 * Hp), jnp.float32)],
        compiler_params=pltpu.CompilerParams(
            dimension_semantics=("parallel",),
            vmem_limit_bytes=vmem1),
    )(x3, h0p, wih, whh, gib, bhn)

    # ---- Stage 2: deferred FC projection, (row-tile, vocab-tile) grid ------
    R = T * Bp
    hall2d = hall.reshape(R, Hp)                 # contiguous collapse (free)
    tr = _pick_tile(R, 8, 512)
    tv = _pick_tile(Vp, 128, 512)
    vmem2 = _vmem_limit([
        ((tr, Hp), jnp.bfloat16), ((Hp, tv), jnp.bfloat16),
        ((1, tv), jnp.float32), ((tr, tv), jnp.float32),
    ])
    logits2d = pl.pallas_call(
        _fc_kernel,
        out_shape=jax.ShapeDtypeStruct((R, Vp), jnp.float32),
        grid=(R // tr, Vp // tv),
        in_specs=[
            pl.BlockSpec((tr, Hp), lambda r, v: (r, 0)),
            pl.BlockSpec((Hp, tv), lambda r, v: (0, v)),
            pl.BlockSpec((1, tv), lambda r, v: (0, v)),
        ],
        out_specs=pl.BlockSpec((tr, tv), lambda r, v: (r, v)),
        compiler_params=pltpu.CompilerParams(
            dimension_semantics=("parallel", "parallel"),
            vmem_limit_bytes=vmem2),
    )(hall2d, wfc, bfc)

    # Drop padding and go back to batch_first (tiny at these sizes).
    # TODO(synk): write logits tiles directly in (B, T, V) layout from the FC
    # out_spec index_map to drop this transpose at large T*B*V.
    logits = jnp.transpose(logits2d.reshape(T, Bp, Vp)[:, :B, :V], (1, 0, 2))
    state = hlast[:B, :H][None, :, :]            # (num_layers=1, B, H)
    return logits, state, None


# --------------------------------------------------------------------------- #
# Parameter packing (torch layout -> lane-padded, gate-packed kernel layout)
# --------------------------------------------------------------------------- #
def pack_params(embedding, w_ih, w_hh, b_ih, b_hh, w_fc, b_fc):
    """Pack torch-layout Decoder weights into the kernel layout.

    torch layouts:
      embedding : (V, E)
      w_ih      : (3H, E)  rows [r | z | n]   (GRU weight_ih_l0)
      w_hh      : (3H, H)  rows [r | z | n]   (GRU weight_hh_l0)
      b_ih,b_hh : (3H,)
      w_fc      : (V, H)   (Linear weight), b_fc : (V,)
    Each gate block / hidden / embedding / vocab dim is zero-padded to a
    multiple of 128 lanes so every in-loop gate slice is whole vregs; zero
    padding keeps the padded hidden positions at exactly 0 through the
    recurrence and contributes nothing to the FC.
    """
    V, E = embedding.shape
    H = w_hh.shape[1]
    Ep, Hp, Vp = _rup(E, 128), _rup(H, 128), _rup(V, 128)
    f32 = jnp.float32

    wih = jnp.zeros((Ep, 3 * Hp), f32)
    whh = jnp.zeros((Hp, 3 * Hp), f32)
    gib = jnp.zeros((1, 3 * Hp), f32)
    for g in range(3):
        wih = wih.at[:E, g * Hp:g * Hp + H].set(w_ih[g * H:(g + 1) * H].T)
        whh = whh.at[:H, g * Hp:g * Hp + H].set(w_hh[g * H:(g + 1) * H].T)
        b = b_ih[g * H:(g + 1) * H]
        if g < 2:                          # fold ONLY r/z hidden biases
            b = b + b_hh[g * H:(g + 1) * H]
        gib = gib.at[0, g * Hp:g * Hp + H].set(b)
    bhn = jnp.zeros((1, Hp), f32).at[0, :H].set(b_hh[2 * H:])

    return {
        "embedding": jnp.zeros((V, Ep), f32).at[:, :E].set(embedding),
        "wih": wih.astype(jnp.bfloat16),
        "whh": whh,
        "gi_bias": gib,
        "bhh_n": bhn,
        "wfc": jnp.zeros((Hp, Vp), f32).at[:H, :V].set(w_fc.T)
                  .astype(jnp.bfloat16),
        "bfc": jnp.zeros((1, Vp), f32).at[0, :V].set(b_fc),
    }


def make_params(key, vocab_size, embedding_dim, dec_units):
    """Deterministic synthetic torch-layout weights -> packed kernel params."""
    H, E, V = dec_units, embedding_dim, vocab_size
    ks = jax.random.split(key, 7)
    s = 1.0 / jnp.sqrt(jnp.float32(H))
    u = lambda k, shape: jax.random.uniform(k, shape, jnp.float32, -s, s)
    emb = jax.random.normal(ks[0], (V, E), jnp.float32)
    w_ih, w_hh = u(ks[1], (3 * H, E)), u(ks[2], (3 * H, H))
    b_ih, b_hh = u(ks[3], (3 * H,)), u(ks[4], (3 * H,))
    w_fc, b_fc = u(ks[5], (V, H)), u(ks[6], (V,))
    return pack_params(emb, w_ih, w_hh, b_ih, b_hh, w_fc, b_fc)


if __name__ == "__main__":
    # Small shapes consistent with the module:
    B, T = 2, 8            # batch, sequence length
    E, H, V = 32, 32, 256  # embedding_dim, dec_units, vocab_size

    key = jax.random.PRNGKey(0)
    kp, kx = jax.random.split(key)

    params = make_params(kp, vocab_size=V, embedding_dim=E, dec_units=H)
    x_ids = jax.random.randint(kx, (B, T), 0, V, dtype=jnp.int32)
    h0 = jnp.zeros((1, B, H), jnp.float32)   # default hidden=None -> zeros

    logits, state, attn = decoder_forward(
        x_ids, h0, params, dec_units=H, vocab_size=V)
    jax.block_until_ready((logits, state))

    assert logits.shape == (B, T, V), logits.shape
    assert state.shape == (1, B, H), state.shape
    assert attn is None
    print("KERNEL_OK")
</pallas_src>

<mosaic_0001>
module attributes {stable_mosaic.version = 11 : i64} {
  func.func @_fc_kernel(%arg0: i32, %arg1: i32, %arg2: memref<64x128xbf16, #tpu.memory_space<vmem>>, %arg3: memref<128x256xbf16, #tpu.memory_space<vmem>>, %arg4: memref<1x256xf32, #tpu.memory_space<vmem>>, %arg5: memref<64x256xf32, #tpu.memory_space<vmem>>) attributes {dimension_semantics = [#tpu.dimension_semantics<parallel>, #tpu.dimension_semantics<parallel>], iteration_bounds = array<i64: 1, 1>, scalar_prefetch = 0 : i64, scratch_operands = 0 : i64, tpu.core_type = #tpu.core_type<tc>, window_params = [{transform_indices = @transform_0, window_bounds = array<i64: 64, 128>}, {transform_indices = @transform_1, window_bounds = array<i64: 128, 256>}, {transform_indices = @transform_2, window_bounds = array<i64: 1, 256>}, {transform_indices = @transform_3, window_bounds = array<i64: 64, 256>}]} {
    %c0 = arith.constant 0 : index
    %c0_0 = arith.constant 0 : index
    %0 = vector.load %arg2[%c0, %c0_0] : memref<64x128xbf16, #tpu.memory_space<vmem>>, vector<64x128xbf16>
    %c0_1 = arith.constant 0 : index
    %c0_2 = arith.constant 0 : index
    %1 = vector.load %arg3[%c0_1, %c0_2] : memref<128x256xbf16, #tpu.memory_space<vmem>>, vector<128x256xbf16>
    %cst = arith.constant dense<0.000000e+00> : vector<64x256xf32>
    %2 = tpu.matmul %0, %1, %cst {dimension_numbers = #tpu.dot_dimension_numbers<[1], [0], [0], [1], [0, 0, 1, 1], [], []>} : vector<64x128xbf16>, vector<128x256xbf16>, vector<64x256xf32> -> vector<64x256xf32>
    %c0_3 = arith.constant 0 : index
    %c0_4 = arith.constant 0 : index
    %3 = vector.load %arg4[%c0_3, %c0_4] : memref<1x256xf32, #tpu.memory_space<vmem>>, vector<1x256xf32>
    %4 = vector.broadcast %3 : vector<1x256xf32> to vector<64x256xf32>
    %5 = arith.addf %2, %4 : vector<64x256xf32>
    %c0_5 = arith.constant 0 : index
    %c0_6 = arith.constant 0 : index
    %6 = vector.load %arg5[%c0_5, %c0_6] : memref<64x256xf32, #tpu.memory_space<vmem>>, vector<64x256xf32>
    tpu.vector_store %arg5[%c0_5, %c0_6], %5 {strides = array<i32>} : memref<64x256xf32, #tpu.memory_space<vmem>>, vector<64x256xf32>,
    return
  }
  func.func @transform_0(%arg0: i32, %arg1: i32) -> (i32, i32) {
    %c0_i32 = arith.constant 0 : i32
    %c0_i32_0 = arith.constant 0 : i32
    return %arg0, %c0_i32 : i32, i32
  }
  func.func @transform_1(%arg0: i32, %arg1: i32) -> (i32, i32) {
    %c0_i32 = arith.constant 0 : i32
    %c0_i32_0 = arith.constant 0 : i32
    return %c0_i32, %arg1 : i32, i32
  }
  func.func @transform_2(%arg0: i32, %arg1: i32) -> (i32, i32) {
    %c0_i32 = arith.constant 0 : i32
    %c0_i32_0 = arith.constant 0 : i32
    return %c0_i32, %arg1 : i32, i32
  }
  func.func @transform_3(%arg0: i32, %arg1: i32) -> (i32, i32) {
    %c0_i32 = arith.constant 0 : i32
    return %arg0, %arg1 : i32, i32
  }
}

module attributes {stable_mosaic.version = 11 : i64} {
  func.func @_gru_kernel(%arg0: i32, %arg1: memref<8x8x128xbf16, #tpu.memory_space<vmem>>, %arg2: memref<8x128xf32, #tpu.memory_space<vmem>>, %arg3: memref<128x384xbf16, #tpu.memory_space<vmem>>, %arg4: memref<128x384xf32, #tpu.memory_space<vmem>>, %arg5: memref<1x384xf32, #tpu.memory_space<vmem>>, %arg6: memref<1x128xf32, #tpu.memory_space<vmem>>, %arg7: memref<8x8x128xbf16, #tpu.memory_space<vmem>>, %arg8: memref<8x128xf32, #tpu.memory_space<vmem>>, %arg9: memref<64x384xf32, #tpu.memory_space<vmem>>) attributes {dimension_semantics = [#tpu.dimension_semantics<parallel>], iteration_bounds = array<i64: 1>, scalar_prefetch = 0 : i64, scratch_operands = 1 : i64, tpu.core_type = #tpu.core_type<tc>, window_params = [{transform_indices = @transform_0, window_bounds = array<i64: 8, 8, 128>}, {transform_indices = @transform_1, window_bounds = array<i64: 8, 128>}, {pipeline_mode = #tpu.pipeline_mode<synchronous>, transform_indices = @transform_2, window_bounds = array<i64: 128, 384>}, {pipeline_mode = #tpu.pipeline_mode<synchronous>, transform_indices = @transform_3, window_bounds = array<i64: 128, 384>}, {pipeline_mode = #tpu.pipeline_mode<synchronous>, transform_indices = @transform_4, window_bounds = array<i64: 1, 384>}, {pipeline_mode = #tpu.pipeline_mode<synchronous>, transform_indices = @transform_5, window_bounds = array<i64: 1, 128>}, {transform_indices = @transform_6, window_bounds = array<i64: 8, 8, 128>}, {transform_indices = @transform_7, window_bounds = array<i64: 8, 128>}]} {
    %c0 = arith.constant 0 : index
    %c0_0 = arith.constant 0 : index
    %c0_1 = arith.constant 0 : index
    %0 = vector.load %arg1[%c0, %c0_0, %c0_1] : memref<8x8x128xbf16, #tpu.memory_space<vmem>>, vector<8x8x128xbf16>
    %1 = vector.shape_cast %0 : vector<8x8x128xbf16> to vector<64x128xbf16>
    %c0_2 = arith.constant 0 : index
    %c0_3 = arith.constant 0 : index
    %2 = vector.load %arg3[%c0_2, %c0_3] : memref<128x384xbf16, #tpu.memory_space<vmem>>, vector<128x384xbf16>
    %cst = arith.constant dense<0.000000e+00> : vector<64x384xf32>
    %3 = tpu.matmul %1, %2, %cst {dimension_numbers = #tpu.dot_dimension_numbers<[1], [0], [0], [1], [0, 0, 1, 1], [], []>} : vector<64x128xbf16>, vector<128x384xbf16>, vector<64x384xf32> -> vector<64x384xf32>
    %c0_4 = arith.constant 0 : index
    %c0_5 = arith.constant 0 : index
    %4 = vector.load %arg5[%c0_4, %c0_5] : memref<1x384xf32, #tpu.memory_space<vmem>>, vector<1x384xf32>
    %5 = vector.broadcast %4 : vector<1x384xf32> to vector<64x384xf32>
    %6 = arith.addf %3, %5 : vector<64x384xf32>
    %c0_6 = arith.constant 0 : index
    %c0_7 = arith.constant 0 : index
    %7 = vector.load %arg9[%c0_6, %c0_7] : memref<64x384xf32, #tpu.memory_space<vmem>>, vector<64x384xf32>
    tpu.vector_store %arg9[%c0_6, %c0_7], %6 {strides = array<i32>} : memref<64x384xf32, #tpu.memory_space<vmem>>, vector<64x384xf32>,
    %c0_8 = arith.constant 0 : index
    %c0_9 = arith.constant 0 : index
    %8 = vector.load %arg4[%c0_8, %c0_9] : memref<128x384xf32, #tpu.memory_space<vmem>>, vector<128x384xf32>
    %c0_10 = arith.constant 0 : index
    %c0_11 = arith.constant 0 : index
    %9 = vector.load %arg6[%c0_10, %c0_11] : memref<1x128xf32, #tpu.memory_space<vmem>>, vector<1x128xf32>
    %10 = vector.shape_cast %9 : vector<1x128xf32> to vector<1x128xf32>
    %11 = vector.broadcast %10 : vector<1x128xf32> to vector<8x128xf32>
    %c0_12 = arith.constant 0 : index
    %c0_13 = arith.constant 0 : index
    %12 = vector.load %arg2[%c0_12, %c0_13] : memref<8x128xf32, #tpu.memory_space<vmem>>, vector<8x128xf32>
    %c0_i32 = arith.constant 0 : i32
    %c8_i32 = arith.constant 8 : i32
    %13 = arith.muli %c0_i32, %c8_i32 : i32
    %14 = tpu.assume_multiple %13, 8 : i32
    %15 = arith.index_cast %14 : i32 to index
    %c0_14 = arith.constant 0 : index
    %16 = vector.load %arg9[%15, %c0_14] : memref<64x384xf32, #tpu.memory_space<vmem>>, vector<8x384xf32>
    %cst_15 = arith.constant dense<0.000000e+00> : vector<8x384xf32>
    %17 = tpu.matmul %12, %8, %cst_15 {dimension_numbers = #tpu.dot_dimension_numbers<[1], [0], [0], [1], [0, 0, 1, 1], [], []>} : vector<8x128xf32>, vector<128x384xf32>, vector<8x384xf32> -> vector<8x384xf32>
    %18 = vector.extract_strided_slice %16 {offsets = [0, 0], sizes = [8, 128], strides = [1, 1]} : vector<8x384xf32> to vector<8x128xf32>
    %19 = vector.extract_strided_slice %17 {offsets = [0, 0], sizes = [8, 128], strides = [1, 1]} : vector<8x384xf32> to vector<8x128xf32>
    %20 = arith.addf %18, %19 : vector<8x128xf32>
    %21 = arith.negf %20 : vector<8x128xf32>
    %22 = math.exp %21 : vector<8x128xf32>
    %cst_16 = arith.constant 1.000000e+00 : f32
    %23 = vector.broadcast %cst_16 : f32 to vector<8x128xf32>
    %24 = arith.addf %23, %22 : vector<8x128xf32>
    %25 = arith.divf %23, %24 : vector<8x128xf32>
    %26 = vector.extract_strided_slice %16 {offsets = [0, 128], sizes = [8, 128], strides = [1, 1]} : vector<8x384xf32> to vector<8x128xf32>
    %27 = vector.extract_strided_slice %17 {offsets = [0, 128], sizes = [8, 128], strides = [1, 1]} : vector<8x384xf32> to vector<8x128xf32>
    %28 = arith.addf %26, %27 : vector<8x128xf32>
    %29 = arith.negf %28 : vector<8x128xf32>
    %30 = math.exp %29 : vector<8x128xf32>
    %cst_17 = arith.constant 1.000000e+00 : f32
    %31 = vector.broadcast %cst_17 : f32 to vector<8x128xf32>
    %32 = arith.addf %31, %30 : vector<8x128xf32>
    %33 = arith.divf %31, %32 : vector<8x128xf32>
    %34 = vector.extract_strided_slice %16 {offsets = [0, 256], sizes = [8, 128], strides = [1, 1]} : vector<8x384xf32> to vector<8x128xf32>
    %35 = vector.extract_strided_slice %17 {offsets = [0, 256], sizes = [8, 128], strides = [1, 1]} : vector<8x384xf32> to vector<8x128xf32>
    %36 = arith.addf %35, %11 : vector<8x128xf32>
    %37 = arith.mulf %25, %36 : vector<8x128xf32>
    %38 = arith.addf %34, %37 : vector<8x128xf32>
    %39 = math.tanh %38 : vector<8x128xf32>
    %cst_18 = arith.constant 1.000000e+00 : f32
    %40 = vector.broadcast %cst_18 : f32 to vector<8x128xf32>
    %41 = arith.subf %40, %33 : vector<8x128xf32>
    %42 = arith.mulf %41, %39 : vector<8x128xf32>
    %43 = arith.mulf %33, %12 : vector<8x128xf32>
    %44 = arith.addf %42, %43 : vector<8x128xf32>
    %45 = arith.truncf %44 : vector<8x128xf32> to vector<8x128xbf16>
    %46 = arith.index_cast %c0_i32 : i32 to index
    %c0_19 = arith.constant 0 : index
    %c0_20 = arith.constant 0 : index
    %47 = vector.load %arg7[%46, %c0_19, %c0_20] : memref<8x8x128xbf16, #tpu.memory_space<vmem>>, vector<1x8x128xbf16>
    %48 = vector.shape_cast %47 : vector<1x8x128xbf16> to vector<8x128xbf16>
    %49 = vector.shape_cast %45 : vector<8x128xbf16> to vector<1x8x128xbf16>
    tpu.vector_store %arg7[%46, %c0_19, %c0_20], %49 {strides = array<i32>} : memref<8x8x128xbf16, #tpu.memory_space<vmem>>, vector<1x8x128xbf16>,
    %c1_i32 = arith.constant 1 : i32
    %c8_i32_21 = arith.constant 8 : i32
    %50 = arith.muli %c1_i32, %c8_i32_21 : i32
    %51 = tpu.assume_multiple %50, 8 : i32
    %52 = arith.index_cast %51 : i32 to index
    %c0_22 = arith.constant 0 : index
    %53 = vector.load %arg9[%52, %c0_22] : memref<64x384xf32, #tpu.memory_space<vmem>>, vector<8x384xf32>
    %cst_23 = arith.constant dense<0.000000e+00> : vector<8x384xf32>
    %54 = tpu.matmul %44, %8, %cst_23 {dimension_numbers = #tpu.dot_dimension_numbers<[1], [0], [0], [1], [0, 0, 1, 1], [], []>} : vector<8x128xf32>, vector<128x384xf32>, vector<8x384xf32> -> vector<8x384xf32>
    %55 = vector.extract_strided_slice %53 {offsets = [0, 0], sizes = [8, 128], strides = [1, 1]} : vector<8x384xf32> to vector<8x128xf32>
    %56 = vector.extract_strided_slice %54 {offsets = [0, 0], sizes = [8, 128], strides = [1, 1]} : vector<8x384xf32> to vector<8x128xf32>
    %57 = arith.addf %55, %56 : vector<8x128xf32>
    %58 = arith.negf %57 : vector<8x128xf32>
    %59 = math.exp %58 : vector<8x128xf32>
    %cst_24 = arith.constant 1.000000e+00 : f32
    %60 = vector.broadcast %cst_24 : f32 to vector<8x128xf32>
    %61 = arith.addf %60, %59 : vector<8x128xf32>
    %62 = arith.divf %60, %61 : vector<8x128xf32>
    %63 = vector.extract_strided_slice %53 {offsets = [0, 128], sizes = [8, 128], strides = [1, 1]} : vector<8x384xf32> to vector<8x128xf32>
    %64 = vector.extract_strided_slice %54 {offsets = [0, 128], sizes = [8, 128], strides = [1, 1]} : vector<8x384xf32> to vector<8x128xf32>
    %65 = arith.addf %63, %64 : vector<8x128xf32>
    %66 = arith.negf %65 : vector<8x128xf32>
    %67 = math.exp %66 : vector<8x128xf32>
    %cst_25 = arith.constant 1.000000e+00 : f32
    %68 = vector.broadcast %cst_25 : f32 to vector<8x128xf32>
    %69 = arith.addf %68, %67 : vector<8x128xf32>
    %70 = arith.divf %68, %69 : vector<8x128xf32>
    %71 = vector.extract_strided_slice %53 {offsets = [0, 256], sizes = [8, 128], strides = [1, 1]} : vector<8x384xf32> to vector<8x128xf32>
    %72 = vector.extract_strided_slice %54 {offsets = [0, 256], sizes = [8, 128], strides = [1, 1]} : vector<8x384xf32> to vector<8x128xf32>
    %73 = arith.addf %72, %11 : vector<8x128xf32>
    %74 = arith.mulf %62, %73 : vector<8x128xf32>
    %75 = arith.addf %71, %74 : vector<8x128xf32>
    %76 = math.tanh %75 : vector<8x128xf32>
    %cst_26 = arith.constant 1.000000e+00 : f32
    %77 = vector.broadcast %cst_26 : f32 to vector<8x128xf32>
    %78 = arith.subf %77, %70 : vector<8x128xf32>
    %79 = arith.mulf %78, %76 : vector<8x128xf32>
    %80 = arith.mulf %70, %44 : vector<8x128xf32>
    %81 = arith.addf %79, %80 : vector<8x128xf32>
    %82 = arith.truncf %81 : vector<8x128xf32> to vector<8x128xbf16>
    %83 = arith.index_cast %c1_i32 : i32 to index
    %c0_27 = arith.constant 0 : index
    %c0_28 = arith.constant 0 : index
    %84 = vector.load %arg7[%83, %c0_27, %c0_28] : memref<8x8x128xbf16, #tpu.memory_space<vmem>>, vector<1x8x128xbf16>
    %85 = vector.shape_cast %84 : vector<1x8x128xbf16> to vector<8x128xbf16>
    %86 = vector.shape_cast %82 : vector<8x128xbf16> to vector<1x8x128xbf16>
    tpu.vector_store %arg7[%83, %c0_27, %c0_28], %86 {strides = array<i32>} : memref<8x8x128xbf16, #tpu.memory_space<vmem>>, vector<1x8x128xbf16>,
    %c2_i32 = arith.constant 2 : i32
    %c8_i32_29 = arith.constant 8 : i32
    %87 = arith.muli %c2_i32, %c8_i32_29 : i32
    %88 = tpu.assume_multiple %87, 8 : i32
    %89 = arith.index_cast %88 : i32 to index
    %c0_30 = arith.constant 0 : index
    %90 = vector.load %arg9[%89, %c0_30] : memref<64x384xf32, #tpu.memory_space<vmem>>, vector<8x384xf32>
    %cst_31 = arith.constant dense<0.000000e+00> : vector<8x384xf32>
    %91 = tpu.matmul %81, %8, %cst_31 {dimension_numbers = #tpu.dot_dimension_numbers<[1], [0], [0], [1], [0, 0, 1, 1], [], []>} : vector<8x128xf32>, vector<128x384xf32>, vector<8x384xf32> -> vector<8x384xf32>
    %92 = vector.extract_strided_slice %90 {offsets = [0, 0], sizes = [8, 128], strides = [1, 1]} : vector<8x384xf32> to vector<8x128xf32>
    %93 = vector.extract_strided_slice %91 {offsets = [0, 0], sizes = [8, 128], strides = [1, 1]} : vector<8x384xf32> to vector<8x128xf32>
    %94 = arith.addf %92, %93 : vector<8x128xf32>
    %95 = arith.negf %94 : vector<8x128xf32>
    %96 = math.exp %95 : vector<8x128xf32>
    %cst_32 = arith.constant 1.000000e+00 : f32
    %97 = vector.broadcast %cst_32 : f32 to vector<8x128xf32>
    %98 = arith.addf %97, %96 : vector<8x128xf32>
    %99 = arith.divf %97, %98 : vector<8x128xf32>
    %100 = vector.extract_strided_slice %90 {offsets = [0, 128], sizes = [8, 128], strides = [1, 1]} : vector<8x384xf32> to vector<8x128xf32>
    %101 = vector.extract_strided_slice %91 {offsets = [0, 128], sizes = [8, 128], strides = [1, 1]} : vector<8x384xf32> to vector<8x128xf32>
    %102 = arith.addf %100, %101 : vector<8x128xf32>
    %103 = arith.negf %102 : vector<8x128xf32>
    %104 = math.exp %103 : vector<8x128xf32>
    %cst_33 = arith.constant 1.000000e+00 : f32
    %105 = vector.broadcast %cst_33 : f32 to vector<8x128xf32>
    %106 = arith.addf %105, %104 : vector<8x128xf32>
    %107 = arith.divf %105, %106 : vector<8x128xf32>
    %108 = vector.extract_strided_slice %90 {offsets = [0, 256], sizes = [8, 128], strides = [1, 1]} : vector<8x384xf32> to vector<8x128xf32>
    %109 = vector.extract_strided_slice %91 {offsets = [0, 256], sizes = [8, 128], strides = [1, 1]} : vector<8x384xf32> to vector<8x128xf32>
    %110 = arith.addf %109, %11 : vector<8x128xf32>
    %111 = arith.mulf %99, %110 : vector<8x128xf32>
    %112 = arith.addf %108, %111 : vector<8x128xf32>
    %113 = math.tanh %112 : vector<8x128xf32>
    %cst_34 = arith.constant 1.000000e+00 : f32
    %114 = vector.broadcast %cst_34 : f32 to vector<8x128xf32>
    %115 = arith.subf %114, %107 : vector<8x128xf32>
    %116 = arith.mulf %115, %113 : vector<8x128xf32>
    %117 = arith.mulf %107, %81 : vector<8x128xf32>
    %118 = arith.addf %116, %117 : vector<8x128xf32>
    %119 = arith.truncf %118 : vector<8x128xf32> to vector<8x128xbf16>
    %120 = arith.index_cast %c2_i32 : i32 to index
    %c0_35 = arith.constant 0 : index
    %c0_36 = arith.constant 0 : index
    %121 = vector.load %arg7[%120, %c0_35, %c0_36] : memref<8x8x128xbf16, #tpu.memory_space<vmem>>, vector<1x8x128xbf16>
    %122 = vector.shape_cast %121 : vector<1x8x128xbf16> to vector<8x128xbf16>
    %123 = vector.shape_cast %119 : vector<8x128xbf16> to vector<1x8x128xbf16>
    tpu.vector_store %arg7[%120, %c0_35, %c0_36], %123 {strides = array<i32>} : memref<8x8x128xbf16, #tpu.memory_space<vmem>>, vector<1x8x128xbf16>,
    %c3_i32 = arith.constant 3 : i32
    %c8_i32_37 = arith.constant 8 : i32
    %124 = arith.muli %c3_i32, %c8_i32_37 : i32
    %125 = tpu.assume_multiple %124, 8 : i32
    %126 = arith.index_cast %125 : i32 to index
    %c0_38 = arith.constant 0 : index
    %127 = vector.load %arg9[%126, %c0_38] : memref<64x384xf32, #tpu.memory_space<vmem>>, vector<8x384xf32>
    %cst_39 = arith.constant dense<0.000000e+00> : vector<8x384xf32>
    %128 = tpu.matmul %118, %8, %cst_39 {dimension_numbers = #tpu.dot_dimension_numbers<[1], [0], [0], [1], [0, 0, 1, 1], [], []>} : vector<8x128xf32>, vector<128x384xf32>, vector<8x384xf32> -> vector<8x384xf32>
    %129 = vector.extract_strided_slice %127 {offsets = [0, 0], sizes = [8, 128], strides = [1, 1]} : vector<8x384xf32> to vector<8x128xf32>
    %130 = vector.extract_strided_slice %128 {offsets = [0, 0], sizes = [8, 128], strides = [1, 1]} : vector<8x384xf32> to vector<8x128xf32>
    %131 = arith.addf %129, %130 : vector<8x128xf32>
    %132 = arith.negf %131 : vector<8x128xf32>
    %133 = math.exp %132 : vector<8x128xf32>
    %cst_40 = arith.constant 1.000000e+00 : f32
    %134 = vector.broadcast %cst_40 : f32 to vector<8x128xf32>
    %135 = arith.addf %134, %133 : vector<8x128xf32>
    %136 = arith.divf %134, %135 : vector<8x128xf32>
    %137 = vector.extract_strided_slice %127 {offsets = [0, 128], sizes = [8, 128], strides = [1, 1]} : vector<8x384xf32> to vector<8x128xf32>
    %138 = vector.extract_strided_slice %128 {offsets = [0, 128], sizes = [8, 128], strides = [1, 1]} : vector<8x384xf32> to vector<8x128xf32>
    %139 = arith.addf %137, %138 : vector<8x128xf32>
    %140 = arith.negf %139 : vector<8x128xf32>
    %141 = math.exp %140 : vector<8x128xf32>
    %cst_41 = arith.constant 1.000000e+00 : f32
    %142 = vector.broadcast %cst_41 : f32 to vector<8x128xf32>
    %143 = arith.addf %142, %141 : vector<8x128xf32>
    %144 = arith.divf %142, %143 : vector<8x128xf32>
    %145 = vector.extract_strided_slice %127 {offsets = [0, 256], sizes = [8, 128], strides = [1, 1]} : vector<8x384xf32> to vector<8x128xf32>
    %146 = vector.extract_strided_slice %128 {offsets = [0, 256], sizes = [8, 128], strides = [1, 1]} : vector<8x384xf32> to vector<8x128xf32>
    %147 = arith.addf %146, %11 : vector<8x128xf32>
    %148 = arith.mulf %136, %147 : vector<8x128xf32>
    %149 = arith.addf %145, %148 : vector<8x128xf32>
    %150 = math.tanh %149 : vector<8x128xf32>
    %cst_42 = arith.constant 1.000000e+00 : f32
    %151 = vector.broadcast %cst_42 : f32 to vector<8x128xf32>
    %152 = arith.subf %151, %144 : vector<8x128xf32>
    %153 = arith.mulf %152, %150 : vector<8x128xf32>
    %154 = arith.mulf %144, %118 : vector<8x128xf32>
    %155 = arith.addf %153, %154 : vector<8x128xf32>
    %156 = arith.truncf %155 : vector<8x128xf32> to vector<8x128xbf16>
    %157 = arith.index_cast %c3_i32 : i32 to index
    %c0_43 = arith.constant 0 : index
    %c0_44 = arith.constant 0 : index
    %158 = vector.load %arg7[%157, %c0_43, %c0_44] : memref<8x8x128xbf16, #tpu.memory_space<vmem>>, vector<1x8x128xbf16>
    %159 = vector.shape_cast %158 : vector<1x8x128xbf16> to vector<8x128xbf16>
    %160 = vector.shape_cast %156 : vector<8x128xbf16> to vector<1x8x128xbf16>
    tpu.vector_store %arg7[%157, %c0_43, %c0_44], %160 {strides = array<i32>} : memref<8x8x128xbf16, #tpu.memory_space<vmem>>, vector<1x8x128xbf16>,
    %c4_i32 = arith.constant 4 : i32
    %c8_i32_45 = arith.constant 8 : i32
    %161 = arith.muli %c4_i32, %c8_i32_45 : i32
    %162 = tpu.assume_multiple %161, 8 : i32
    %163 = arith.index_cast %162 : i32 to index
    %c0_46 = arith.constant 0 : index
    %164 = vector.load %arg9[%163, %c0_46] : memref<64x384xf32, #tpu.memory_space<vmem>>, vector<8x384xf32>
    %cst_47 = arith.constant dense<0.000000e+00> : vector<8x384xf32>
    %165 = tpu.matmul %155, %8, %cst_47 {dimension_numbers = #tpu.dot_dimension_numbers<[1], [0], [0], [1], [0, 0, 1, 1], [], []>} : vector<8x128xf32>, vector<128x384xf32>, vector<8x384xf32> -> vector<8x384xf32>
    %166 = vector.extract_strided_slice %164 {offsets = [0, 0], sizes = [8, 128], strides = [1, 1]} : vector<8x384xf32> to vector<8x128xf32>
    %167 = vector.extract_strided_slice %165 {offsets = [0, 0], sizes = [8, 128], strides = [1, 1]} : vector<8x384xf32> to vector<8x128xf32>
    %168 = arith.addf %166, %167 : vector<8x128xf32>
    %169 = arith.negf %168 : vector<8x128xf32>
    %170 = math.exp %169 : vector<8x128xf32>
    %cst_48 = arith.constant 1.000000e+00 : f32
    %171 = vector.broadcast %cst_48 : f32 to vector<8x128xf32>
    %172 = arith.addf %171, %170 : vector<8x128xf32>
    %173 = arith.divf %171, %172 : vector<8x128xf32>
    %174 = vector.extract_strided_slice %164 {offsets = [0, 128], sizes = [8, 128], strides = [1, 1]} : vector<8x384xf32> to vector<8x128xf32>
    %175 = vector.extract_strided_slice %165 {offsets = [0, 128], sizes = [8, 128], strides = [1, 1]} : vector<8x384xf32> to vector<8x128xf32>
    %176 = arith.addf %174, %175 : vector<8x128xf32>
    %177 = arith.negf %176 : vector<8x128xf32>
    %178 = math.exp %177 : vector<8x128xf32>
    %cst_49 = arith.constant 1.000000e+00 : f32
    %179 = vector.broadcast %cst_49 : f32 to vector<8x128xf32>
    %180 = arith.addf %179, %178 : vector<8x128xf32>
    %181 = arith.divf %179, %180 : vector<8x128xf32>
    %182 = vector.extract_strided_slice %164 {offsets = [0, 256], sizes = [8, 128], strides = [1, 1]} : vector<8x384xf32> to vector<8x128xf32>
    %183 = vector.extract_strided_slice %165 {offsets = [0, 256], sizes = [8, 128], strides = [1, 1]} : vector<8x384xf32> to vector<8x128xf32>
    %184 = arith.addf %183, %11 : vector<8x128xf32>
    %185 = arith.mulf %173, %184 : vector<8x128xf32>
    %186 = arith.addf %182, %185 : vector<8x128xf32>
    %187 = math.tanh %186 : vector<8x128xf32>
    %cst_50 = arith.constant 1.000000e+00 : f32
    %188 = vector.broadcast %cst_50 : f32 to vector<8x128xf32>
    %189 = arith.subf %188, %181 : vector<8x128xf32>
    %190 = arith.mulf %189, %187 : vector<8x128xf32>
    %191 = arith.mulf %181, %155 : vector<8x128xf32>
    %192 = arith.addf %190, %191 : vector<8x128xf32>
    %193 = arith.truncf %192 : vector<8x128xf32> to vector<8x128xbf16>
    %194 = arith.index_cast %c4_i32 : i32 to index
    %c0_51 = arith.constant 0 : index
    %c0_52 = arith.constant 0 : index
    %195 = vector.load %arg7[%194, %c0_51, %c0_52] : memref<8x8x128xbf16, #tpu.memory_space<vmem>>, vector<1x8x128xbf16>
    %196 = vector.shape_cast %195 : vector<1x8x128xbf16> to vector<8x128xbf16>
    %197 = vector.shape_cast %193 : vector<8x128xbf16> to vector<1x8x128xbf16>
    tpu.vector_store %arg7[%194, %c0_51, %c0_52], %197 {strides = array<i32>} : memref<8x8x128xbf16, #tpu.memory_space<vmem>>, vector<1x8x128xbf16>,
    %c5_i32 = arith.constant 5 : i32
    %c8_i32_53 = arith.constant 8 : i32
    %198 = arith.muli %c5_i32, %c8_i32_53 : i32
    %199 = tpu.assume_multiple %198, 8 : i32
    %200 = arith.index_cast %199 : i32 to index
    %c0_54 = arith.constant 0 : index
    %201 = vector.load %arg9[%200, %c0_54] : memref<64x384xf32, #tpu.memory_space<vmem>>, vector<8x384xf32>
    %cst_55 = arith.constant dense<0.000000e+00> : vector<8x384xf32>
    %202 = tpu.matmul %192, %8, %cst_55 {dimension_numbers = #tpu.dot_dimension_numbers<[1], [0], [0], [1], [0, 0, 1, 1], [], []>} : vector<8x128xf32>, vector<128x384xf32>, vector<8x384xf32> -> vector<8x384xf32>
    %203 = vector.extract_strided_slice %201 {offsets = [0, 0], sizes = [8, 128], strides = [1, 1]} : vector<8x384xf32> to vector<8x128xf32>
    %204 = vector.extract_strided_slice %202 {offsets = [0, 0], sizes = [8, 128], strides = [1, 1]} : vector<8x384xf32> to vector<8x128xf32>
    %205 = arith.addf %203, %204 : vector<8x128xf32>
    %206 = arith.negf %205 : vector<8x128xf32>
    %207 = math.exp %206 : vector<8x128xf32>
    %cst_56 = arith.constant 1.000000e+00 : f32
    %208 = vector.broadcast %cst_56 : f32 to vector<8x128xf32>
    %209 = arith.addf %208, %207 : vector<8x128xf32>
    %210 = arith.divf %208, %209 : vector<8x128xf32>
    %211 = vector.extract_strided_slice %201 {offsets = [0, 128], sizes = [8, 128], strides = [1, 1]} : vector<8x384xf32> to vector<8x128xf32>
    %212 = vector.extract_strided_slice %202 {offsets = [0, 128], sizes = [8, 128], strides = [1, 1]} : vector<8x384xf32> to vector<8x128xf32>
    %213 = arith.addf %211, %212 : vector<8x128xf32>
    %214 = arith.negf %213 : vector<8x128xf32>
    %215 = math.exp %214 : vector<8x128xf32>
    %cst_57 = arith.constant 1.000000e+00 : f32
    %216 = vector.broadcast %cst_57 : f32 to vector<8x128xf32>
    %217 = arith.addf %216, %215 : vector<8x128xf32>
    %218 = arith.divf %216, %217 : vector<8x128xf32>
    %219 = vector.extract_strided_slice %201 {offsets = [0, 256], sizes = [8, 128], strides = [1, 1]} : vector<8x384xf32> to vector<8x128xf32>
    %220 = vector.extract_strided_slice %202 {offsets = [0, 256], sizes = [8, 128], strides = [1, 1]} : vector<8x384xf32> to vector<8x128xf32>
    %221 = arith.addf %220, %11 : vector<8x128xf32>
    %222 = arith.mulf %210, %221 : vector<8x128xf32>
    %223 = arith.addf %219, %222 : vector<8x128xf32>
    %224 = math.tanh %223 : vector<8x128xf32>
    %cst_58 = arith.constant 1.000000e+00 : f32
    %225 = vector.broadcast %cst_58 : f32 to vector<8x128xf32>
    %226 = arith.subf %225, %218 : vector<8x128xf32>
    %227 = arith.mulf %226, %224 : vector<8x128xf32>
    %228 = arith.mulf %218, %192 : vector<8x128xf32>
    %229 = arith.addf %227, %228 : vector<8x128xf32>
    %230 = arith.truncf %229 : vector<8x128xf32> to vector<8x128xbf16>
    %231 = arith.index_cast %c5_i32 : i32 to index
    %c0_59 = arith.constant 0 : index
    %c0_60 = arith.constant 0 : index
    %232 = vector.load %arg7[%231, %c0_59, %c0_60] : memref<8x8x128xbf16, #tpu.memory_space<vmem>>, vector<1x8x128xbf16>
    %233 = vector.shape_cast %232 : vector<1x8x128xbf16> to vector<8x128xbf16>
    %234 = vector.shape_cast %230 : vector<8x128xbf16> to vector<1x8x128xbf16>
    tpu.vector_store %arg7[%231, %c0_59, %c0_60], %234 {strides = array<i32>} : memref<8x8x128xbf16, #tpu.memory_space<vmem>>, vector<1x8x128xbf16>,
    %c6_i32 = arith.constant 6 : i32
    %c8_i32_61 = arith.constant 8 : i32
    %235 = arith.muli %c6_i32, %c8_i32_61 : i32
    %236 = tpu.assume_multiple %235, 8 : i32
    %237 = arith.index_cast %236 : i32 to index
    %c0_62 = arith.constant 0 : index
    %238 = vector.load %arg9[%237, %c0_62] : memref<64x384xf32, #tpu.memory_space<vmem>>, vector<8x384xf32>
    %cst_63 = arith.constant dense<0.000000e+00> : vector<8x384xf32>
    %239 = tpu.matmul %229, %8, %cst_63 {dimension_numbers = #tpu.dot_dimension_numbers<[1], [0], [0], [1], [0, 0, 1, 1], [], []>} : vector<8x128xf32>, vector<128x384xf32>, vector<8x384xf32> -> vector<8x384xf32>
    %240 = vector.extract_strided_slice %238 {offsets = [0, 0], sizes = [8, 128], strides = [1, 1]} : vector<8x384xf32> to vector<8x128xf32>
    %241 = vector.extract_strided_slice %239 {offsets = [0, 0], sizes = [8, 128], strides = [1, 1]} : vector<8x384xf32> to vector<8x128xf32>
    %242 = arith.addf %240, %241 : vector<8x128xf32>
    %243 = arith.negf %242 : vector<8x128xf32>
    %244 = math.exp %243 : vector<8x128xf32>
    %cst_64 = arith.constant 1.000000e+00 : f32
    %245 = vector.broadcast %cst_64 : f32 to vector<8x128xf32>
    %246 = arith.addf %245, %244 : vector<8x128xf32>
    %247 = arith.divf %245, %246 : vector<8x128xf32>
    %248 = vector.extract_strided_slice %238 {offsets = [0, 128], sizes = [8, 128], strides = [1, 1]} : vector<8x384xf32> to vector<8x128xf32>
    %249 = vector.extract_strided_slice %239 {offsets = [0, 128], sizes = [8, 128], strides = [1, 1]} : vector<8x384xf32> to vector<8x128xf32>
    %250 = arith.addf %248, %249 : vector<8x128xf32>
    %251 = arith.negf %250 : vector<8x128xf32>
    %252 = math.exp %251 : vector<8x128xf32>
    %cst_65 = arith.constant 1.000000e+00 : f32
    %253 = vector.broadcast %cst_65 : f32 to vector<8x128xf32>
    %254 = arith.addf %253, %252 : vector<8x128xf32>
    %255 = arith.divf %253, %254 : vector<8x128xf32>
    %256 = vector.extract_strided_slice %238 {offsets = [0, 256], sizes = [8, 128], strides = [1, 1]} : vector<8x384xf32> to vector<8x128xf32>
    %257 = vector.extract_strided_slice %239 {offsets = [0, 256], sizes = [8, 128], strides = [1, 1]} : vector<8x384xf32> to vector<8x128xf32>
    %258 = arith.addf %257, %11 : vector<8x128xf32>
    %259 = arith.mulf %247, %258 : vector<8x128xf32>
    %260 = arith.addf %256, %259 : vector<8x128xf32>
    %261 = math.tanh %260 : vector<8x128xf32>
    %cst_66 = arith.constant 1.000000e+00 : f32
    %262 = vector.broadcast %cst_66 : f32 to vector<8x128xf32>
    %263 = arith.subf %262, %255 : vector<8x128xf32>
    %264 = arith.mulf %263, %261 : vector<8x128xf32>
    %265 = arith.mulf %255, %229 : vector<8x128xf32>
    %266 = arith.addf %264, %265 : vector<8x128xf32>
    %267 = arith.truncf %266 : vector<8x128xf32> to vector<8x128xbf16>
    %268 = arith.index_cast %c6_i32 : i32 to index
    %c0_67 = arith.constant 0 : index
    %c0_68 = arith.constant 0 : index
    %269 = vector.load %arg7[%268, %c0_67, %c0_68] : memref<8x8x128xbf16, #tpu.memory_space<vmem>>, vector<1x8x128xbf16>
    %270 = vector.shape_cast %269 : vector<1x8x128xbf16> to vector<8x128xbf16>
    %271 = vector.shape_cast %267 : vector<8x128xbf16> to vector<1x8x128xbf16>
    tpu.vector_store %arg7[%268, %c0_67, %c0_68], %271 {strides = array<i32>} : memref<8x8x128xbf16, #tpu.memory_space<vmem>>, vector<1x8x128xbf16>,
    %c7_i32 = arith.constant 7 : i32
    %c8_i32_69 = arith.constant 8 : i32
    %272 = arith.muli %c7_i32, %c8_i32_69 : i32
    %273 = tpu.assume_multiple %272, 8 : i32
    %274 = arith.index_cast %273 : i32 to index
    %c0_70 = arith.constant 0 : index
    %275 = vector.load %arg9[%274, %c0_70] : memref<64x384xf32, #tpu.memory_space<vmem>>, vector<8x384xf32>
    %cst_71 = arith.constant dense<0.000000e+00> : vector<8x384xf32>
    %276 = tpu.matmul %266, %8, %cst_71 {dimension_numbers = #tpu.dot_dimension_numbers<[1], [0], [0], [1], [0, 0, 1, 1], [], []>} : vector<8x128xf32>, vector<128x384xf32>, vector<8x384xf32> -> vector<8x384xf32>
    %277 = vector.extract_strided_slice %275 {offsets = [0, 0], sizes = [8, 128], strides = [1, 1]} : vector<8x384xf32> to vector<8x128xf32>
    %278 = vector.extract_strided_slice %276 {offsets = [0, 0], sizes = [8, 128], strides = [1, 1]} : vector<8x384xf32> to vector<8x128xf32>
    %279 = arith.addf %277, %278 : vector<8x128xf32>
    %280 = arith.negf %279 : vector<8x128xf32>
    %281 = math.exp %280 : vector<8x128xf32>
    %cst_72 = arith.constant 1.000000e+00 : f32
    %282 = vector.broadcast %cst_72 : f32 to vector<8x128xf32>
    %283 = arith.addf %282, %281 : vector<8x128xf32>
    %284 = arith.divf %282, %283 : vector<8x128xf32>
    %285 = vector.extract_strided_slice %275 {offsets = [0, 128], sizes = [8, 128], strides = [1, 1]} : vector<8x384xf32> to vector<8x128xf32>
    %286 = vector.extract_strided_slice %276 {offsets = [0, 128], sizes = [8, 128], strides = [1, 1]} : vector<8x384xf32> to vector<8x128xf32>
    %287 = arith.addf %285, %286 : vector<8x128xf32>
    %288 = arith.negf %287 : vector<8x128xf32>
    %289 = math.exp %288 : vector<8x128xf32>
    %cst_73 = arith.constant 1.000000e+00 : f32
    %290 = vector.broadcast %cst_73 : f32 to vector<8x128xf32>
    %291 = arith.addf %290, %289 : vector<8x128xf32>
    %292 = arith.divf %290, %291 : vector<8x128xf32>
    %293 = vector.extract_strided_slice %275 {offsets = [0, 256], sizes = [8, 128], strides = [1, 1]} : vector<8x384xf32> to vector<8x128xf32>
    %294 = vector.extract_strided_slice %276 {offsets = [0, 256], sizes = [8, 128], strides = [1, 1]} : vector<8x384xf32> to vector<8x128xf32>
    %295 = arith.addf %294, %11 : vector<8x128xf32>
    %296 = arith.mulf %284, %295 : vector<8x128xf32>
    %297 = arith.addf %293, %296 : vector<8x128xf32>
    %298 = math.tanh %297 : vector<8x128xf32>
    %cst_74 = arith.constant 1.000000e+00 : f32
    %299 = vector.broadcast %cst_74 : f32 to vector<8x128xf32>
    %300 = arith.subf %299, %292 : vector<8x128xf32>
    %301 = arith.mulf %300, %298 : vector<8x128xf32>
    %302 = arith.mulf %292, %266 : vector<8x128xf32>
    %303 = arith.addf %301, %302 : vector<8x128xf32>
    %304 = arith.truncf %303 : vector<8x128xf32> to vector<8x128xbf16>
    %305 = arith.index_cast %c7_i32 : i32 to index
    %c0_75 = arith.constant 0 : index
    %c0_76 = arith.constant 0 : index
    %306 = vector.load %arg7[%305, %c0_75, %c0_76] : memref<8x8x128xbf16, #tpu.memory_space<vmem>>, vector<1x8x128xbf16>
    %307 = vector.shape_cast %306 : vector<1x8x128xbf16> to vector<8x128xbf16>
    %308 = vector.shape_cast %304 : vector<8x128xbf16> to vector<1x8x128xbf16>
    tpu.vector_store %arg7[%305, %c0_75, %c0_76], %308 {strides = array<i32>} : memref<8x8x128xbf16, #tpu.memory_space<vmem>>, vector<1x8x128xbf16>,
    %c8_i32_77 = arith.constant 8 : i32
    %c0_78 = arith.constant 0 : index
    %c0_79 = arith.constant 0 : index
    %309 = vector.load %arg8[%c0_78, %c0_79] : memref<8x128xf32, #tpu.memory_space<vmem>>, vector<8x128xf32>
    tpu.vector_store %arg8[%c0_78, %c0_79], %303 {strides = array<i32>} : memref<8x128xf32, #tpu.memory_space<vmem>>, vector<8x128xf32>,
    return
  }
  func.func @transform_0(%arg0: i32) -> (i32, i32, i32) {
    %c0_i32 = arith.constant 0 : i32
    %c0_i32_0 = arith.constant 0 : i32
    %c0_i32_1 = arith.constant 0 : i32
    return %c0_i32, %arg0, %c0_i32_0 : i32, i32, i32
  }
  func.func @transform_1(%arg0: i32) -> (i32, i32) {
    %c0_i32 = arith.constant 0 : i32
    %c0_i32_0 = arith.constant 0 : i32
    return %arg0, %c0_i32 : i32, i32
  }
  func.func @transform_2(%arg0: i32) -> (i32, i32) {
    %c0_i32 = arith.constant 0 : i32
    %c0_i32_0 = arith.constant 0 : i32
    %c0_i32_1 = arith.constant 0 : i32
    return %c0_i32, %c0_i32_0 : i32, i32
  }
  func.func @transform_3(%arg0: i32) -> (i32, i32) {
    %c0_i32 = arith.constant 0 : i32
    %c0_i32_0 = arith.constant 0 : i32
    %c0_i32_1 = arith.constant 0 : i32
    return %c0_i32, %c0_i32_0 : i32, i32
  }
  func.func @transform_4(%arg0: i32) -> (i32, i32) {
    %c0_i32 = arith.constant 0 : i32
    %c0_i32_0 = arith.constant 0 : i32
    %c0_i32_1 = arith.constant 0 : i32
    return %c0_i32, %c0_i32_0 : i32, i32
  }
  func.func @transform_5(%arg0: i32) -> (i32, i32) {
    %c0_i32 = arith.constant 0 : i32
    %c0_i32_0 = arith.constant 0 : i32
    %c0_i32_1 = arith.constant 0 : i32
    return %c0_i32, %c0_i32_0 : i32, i32
  }
  func.func @transform_6(%arg0: i32) -> (i32, i32, i32) {
    %c0_i32 = arith.constant 0 : i32
    %c0_i32_0 = arith.constant 0 : i32
    %c0_i32_1 = arith.constant 0 : i32
    return %c0_i32, %arg0, %c0_i32_0 : i32, i32, i32
  }
  func.func @transform_7(%arg0: i32) -> (i32, i32) {
    %c0_i32 = arith.constant 0 : i32
    %c0_i32_0 = arith.constant 0 : i32
    return %arg0, %c0_i32 : i32, i32
  }
}

</mosaic_0001>

<llo_original>
// kernel: decoder_forward.3
$region0: #{decoder_forward.3}
  #allocation0 [shape = 'u32[]', space=smem, size = 0x4, offset = 0x4, fixed_abs, tag = 'smem constant byte address 0x4 - core index']
  #allocation1 [shape = 'u32[72,128]{1,0:T(1,128)}', space=vmem, size = 0x9000, scoped, tag = 'internal scratch']
  %s0 = inlined_call_operand.vmem [shape: bf16[64,128], index: 0, kind: input, shape index: {}]
  %s1 = inlined_call_operand.vmem [shape: bf16[128,256], index: 1, kind: input, shape index: {}]
  %s2 = inlined_call_operand.vmem [shape: f32[1,256], index: 2, kind: input, shape index: {}]
  %s3 = inlined_call_operand.vmem [shape: f32[64,256], index: 3, kind: output, shape index: {}]
  %s4 = sld [smem:[#allocation0]]
  $region22: #{decoder_forward.3} parent=0
    _
  %s6 = ssub.s32 1, %s4
  %s7 = scalar_select 0, %s6, %s4
  // Predicated region
  $region2: #{decoder_forward.3} parent=0 // pred_check
    _
  $region3: #{decoder_forward.3} parent=0 // pred_check_branch
    %9 = sbr.rel (0) target = $region5
  $region4: #{decoder_forward.3} parent=0 // pred_region
    _
  $region5: #{decoder_forward.3} parent=0 // pred_fallthru
    _
  // Predicated region
  $region6: #{decoder_forward.3} parent=0 // pred_check
    _
  $region7: #{decoder_forward.3} parent=0 // pred_check_branch
    %11 = sbr.rel (0) target = $region9
  $region8: #{decoder_forward.3} parent=0 // pred_region
    _
  $region9: #{decoder_forward.3} parent=0 // pred_fallthru
    _
  // Predicated region
  $region10: #{decoder_forward.3} parent=0 // pred_check
    _
  $region11: #{decoder_forward.3} parent=0 // pred_check_branch
    %13 = sbr.rel (0) target = $region13
  $region12: #{decoder_forward.3} parent=0 // pred_region
    _
  $region13: #{decoder_forward.3} parent=0 // pred_fallthru
    _
  %v14 = vld [vmem:[%s0] sm:$0xf]
  %v15 = vld [vmem:[%s0 + $0x4] sm:$0xf]
  %v16 = vld [vmem:[%s0 + $0x8] sm:$0xf]
  %v17 = vld [vmem:[%s0 + $0xc] sm:$0xf]
  %v18 = vld [vmem:[%s0 + $0x10] sm:$0xf]
  %v19 = vld [vmem:[%s0 + $0x14] sm:$0xf]
  %v20 = vld [vmem:[%s0 + $0x18] sm:$0xf]
  %v21 = vld [vmem:[%s0 + $0x1c] sm:$0xf]
  %v22 = vld [vmem:[%s1] sm:$0xff]
  %v23 = vld [vmem:[%s1 + $0x8] sm:$0xff]
  %v24 = vld [vmem:[%s1 + $0x10] sm:$0xff]
  %v25 = vld [vmem:[%s1 + $0x18] sm:$0xff]
  %v26 = vld [vmem:[%s1 + $0x20] sm:$0xff]
  %v27 = vld [vmem:[%s1 + $0x28] sm:$0xff]
  %v28 = vld [vmem:[%s1 + $0x30] sm:$0xff]
  %v29 = vld [vmem:[%s1 + $0x38] sm:$0xff]
  %v30 = vld [vmem:[%s1 + $0x40] sm:$0xff]
  %v31 = vld [vmem:[%s1 + $0x48] sm:$0xff]
  %v32 = vld [vmem:[%s1 + $0x50] sm:$0xff]
  %v33 = vld [vmem:[%s1 + $0x58] sm:$0xff]
  %v34 = vld [vmem:[%s1 + $0x60] sm:$0xff]
  %v35 = vld [vmem:[%s1 + $0x68] sm:$0xff]
  %v36 = vld [vmem:[%s1 + $0x70] sm:$0xff]
  %v37 = vld [vmem:[%s1 + $0x78] sm:$0xff]
  %v38 = vld [vmem:[%s2] sm:$0x3]
  %v40 = vperm.slane %v38, 0
  %v41 = vperm.slane %v38, 1
  %v52 = vunpack.c.l.b16 %v14
  %v53 = vunpack.c.l.b16 %v15
  %v54 = vunpack.c.l.b16 %v16
  %v55 = vunpack.c.l.b16 %v17
  %v56 = vunpack.c.l.b16 %v18
  %v57 = vunpack.c.l.b16 %v19
  %v58 = vunpack.c.l.b16 %v20
  %v59 = vunpack.c.l.b16 %v21
  %v60 = vpack.c.b16 %v53, %v52
  %v61 = vpack.c.b16 %v55, %v54
  %v62 = vpack.c.b16 %v57, %v56
  %v63 = vpack.c.b16 %v59, %v58
  %v84 = vunpack.c.l.b16 %v22
  %v85 = vunpack.c.h.b16 %v22
  %v86 = vunpack.c.l.b16 %v23
  %v87 = vunpack.c.h.b16 %v23
  %v88 = vunpack.c.l.b16 %v24
  %v89 = vunpack.c.h.b16 %v24
  %v90 = vunpack.c.l.b16 %v25
  %v91 = vunpack.c.h.b16 %v25
  %v92 = vunpack.c.l.b16 %v26
  %v93 = vunpack.c.h.b16 %v26
  %v94 = vunpack.c.l.b16 %v27
  %v95 = vunpack.c.h.b16 %v27
  %v96 = vunpack.c.l.b16 %v28
  %v97 = vunpack.c.h.b16 %v28
  %v98 = vunpack.c.l.b16 %v29
  %v99 = vunpack.c.h.b16 %v29
  %v100 = vunpack.c.l.b16 %v30
  %v101 = vunpack.c.h.b16 %v30
  %v102 = vunpack.c.l.b16 %v31
  %v103 = vunpack.c.h.b16 %v31
  %v104 = vunpack.c.l.b16 %v32
  %v105 = vunpack.c.h.b16 %v32
  %v106 = vunpack.c.l.b16 %v33
  %v107 = vunpack.c.h.b16 %v33
  %v108 = vunpack.c.l.b16 %v34
  %v109 = vunpack.c.h.b16 %v34
  %v110 = vunpack.c.l.b16 %v35
  %v111 = vunpack.c.h.b16 %v35
  %v112 = vunpack.c.l.b16 %v36
  %v113 = vunpack.c.h.b16 %v36
  %v114 = vunpack.c.l.b16 %v37
  %v115 = vunpack.c.h.b16 %v37
  %v116 = vpack.c.b16 %v86, %v84
  %v117 = vpack.c.b16 %v87, %v85
  %v118 = vpack.c.b16 %v90, %v88
  %v119 = vpack.c.b16 %v91, %v89
  %v120 = vpack.c.b16 %v94, %v92
  %v121 = vpack.c.b16 %v95, %v93
  %v122 = vpack.c.b16 %v98, %v96
  %v123 = vpack.c.b16 %v99, %v97
  %v124 = vpack.c.b16 %v102, %v100
  %v125 = vpack.c.b16 %v103, %v101
  %v126 = vpack.c.b16 %v106, %v104
  %v127 = vpack.c.b16 %v107, %v105
  %v128 = vpack.c.b16 %v110, %v108
  %v129 = vpack.c.b16 %v111, %v109
  %v130 = vpack.c.b16 %v114, %v112
  %v131 = vpack.c.b16 %v115, %v113
  %148 = vmatpush.bf16.msra.mxu0 %v130
  %149 = vmatpush.bf16.msra.mxu0 %v128
  %150 = vmatpush.bf16.msra.mxu0 %v126
  %151 = vmatpush.bf16.msra.mxu0 %v124
  %152 = vmatpush.bf16.msra.mxu0 %v122
  %153 = vmatpush.bf16.msra.mxu0 %v120
  %154 = vmatpush.bf16.msra.mxu0 %v118
  %155 = vmatpush.bf16.msra.mxu0 %v116
  %156 = vmatmul.bf16.gmra.mxu0 %v60
  %v157 = vpop.f32.mrf.mxu0
  %v158 = vadd.f32 %v40, %v157
  %v159 = vpop.f32.mrf.mxu0
  %v160 = vadd.f32 %v40, %v159
  %161 = vmatmul.bf16.gmra.mxu0 %v61
  %v162 = vpop.f32.mrf.mxu0
  %v163 = vadd.f32 %v40, %v162
  %v164 = vpop.f32.mrf.mxu0
  %v165 = vadd.f32 %v40, %v164
  %166 = vmatmul.bf16.gmra.mxu0 %v62
  %v167 = vpop.f32.mrf.mxu0
  %v168 = vadd.f32 %v40, %v167
  %v169 = vpop.f32.mrf.mxu0
  %v170 = vadd.f32 %v40, %v169
  %171 = vmatmul.bf16.gmra.mxu0 %v63
  %v172 = vpop.f32.mrf.mxu0
  %v173 = vadd.f32 %v40, %v172
  %v174 = vpop.f32.mrf.mxu0
  %v175 = vadd.f32 %v40, %v174
  %176 = vdwg.mxu0
  %177 = vmatpush.bf16.msra.mxu0 %v131
  %178 = vmatpush.bf16.msra.mxu0 %v129
  %179 = vmatpush.bf16.msra.mxu0 %v127
  %180 = vmatpush.bf16.msra.mxu0 %v125
  %181 = vmatpush.bf16.msra.mxu0 %v123
  %182 = vmatpush.bf16.msra.mxu0 %v121
  %183 = vmatpush.bf16.msra.mxu0 %v119
  %184 = vmatpush.bf16.msra.mxu0 %v117
  %185 = vmatmul.bf16.gmra.mxu0 %v60
  %v186 = vpop.f32.mrf.mxu0
  %v187 = vadd.f32 %v41, %v186
  %v188 = vpop.f32.mrf.mxu0
  %v189 = vadd.f32 %v41, %v188
  %190 = vmatmul.bf16.gmra.mxu0 %v61
  %v191 = vpop.f32.mrf.mxu0
  %v192 = vadd.f32 %v41, %v191
  %v193 = vpop.f32.mrf.mxu0
  %v194 = vadd.f32 %v41, %v193
  %195 = vmatmul.bf16.gmra.mxu0 %v62
  %v196 = vpop.f32.mrf.mxu0
  %v197 = vadd.f32 %v41, %v196
  %v198 = vpop.f32.mrf.mxu0
  %v199 = vadd.f32 %v41, %v198
  %200 = vmatmul.bf16.gmra.mxu0 %v63
  %v201 = vpop.f32.mrf.mxu0
  %v202 = vadd.f32 %v41, %v201
  %v203 = vpop.f32.mrf.mxu0
  %v204 = vadd.f32 %v41, %v203
  %205 = vdwg.mxu0
  %206 = vst [vmem:[%s3] sm:$0xff] %v158
  %207 = vst [vmem:[%s3 + $0x8] sm:$0xff] %v187
  %208 = vst [vmem:[%s3 + $0x10] sm:$0xff] %v160
  %209 = vst [vmem:[%s3 + $0x18] sm:$0xff] %v189
  %210 = vst [vmem:[%s3 + $0x20] sm:$0xff] %v163
  %211 = vst [vmem:[%s3 + $0x28] sm:$0xff] %v192
  %212 = vst [vmem:[%s3 + $0x30] sm:$0xff] %v165
  %213 = vst [vmem:[%s3 + $0x38] sm:$0xff] %v194
  %214 = vst [vmem:[%s3 + $0x40] sm:$0xff] %v168
  %215 = vst [vmem:[%s3 + $0x48] sm:$0xff] %v197
  %216 = vst [vmem:[%s3 + $0x50] sm:$0xff] %v170
  %217 = vst [vmem:[%s3 + $0x58] sm:$0xff] %v199
  %218 = vst [vmem:[%s3 + $0x60] sm:$0xff] %v173
  %219 = vst [vmem:[%s3 + $0x68] sm:$0xff] %v202
  %220 = vst [vmem:[%s3 + $0x70] sm:$0xff] %v175
  %221 = vst [vmem:[%s3 + $0x78] sm:$0xff] %v204
  // Predicated region
  $region14: #{decoder_forward.3} parent=0 // pred_check
    _
  $region15: #{decoder_forward.3} parent=0 // pred_check_branch
    %223 = sbr.rel (0) target = $region17
  $region16: #{decoder_forward.3} parent=0 // pred_region
    _
  $region17: #{decoder_forward.3} parent=0 // pred_fallthru
    _
  // Predicated region
  $region18: #{decoder_forward.3} parent=0 // pred_check
    _
  $region19: #{decoder_forward.3} parent=0 // pred_check_branch
    %225 = sbr.rel (0) target = $region21
  $region20: #{decoder_forward.3} parent=0 // pred_region
    _
  $region21: #{decoder_forward.3} parent=0 // pred_fallthru
    _

// kernel: decoder_forward.2
$region0: #{decoder_forward.2}
  #allocation0 [shape = 'u32[]', space=smem, size = 0x4, offset = 0x4, fixed_abs, tag = 'smem constant byte address 0x4 - core index']
  #allocation1 [shape = 'u32[72,128]{1,0:T(1,128)}', space=vmem, size = 0x9000, scoped, tag = 'internal scratch']
  #allocation2 [shape = 'f32[64,384]{1,0:T(8,128)}', space=vmem, size = 0x18000, scoped, tag = 'scratch operand']
  %s0 = inlined_call_operand.vmem [shape: bf16[8,8,128], index: 0, kind: input, shape index: {}]
  %s1 = inlined_call_operand.vmem [shape: f32[8,128], index: 1, kind: input, shape index: {}]
  %s2 = inlined_call_operand.vmem [shape: bf16[128,384], index: 2, kind: input, shape index: {}]
  %s3 = inlined_call_operand.hbm [shape: f32[128,384], index: 3, kind: input, shape index: {}]
  %s4 = inlined_call_operand.vmem [shape: f32[1,384], index: 4, kind: input, shape index: {}]
  %s5 = inlined_call_operand.vmem [shape: f32[1,128], index: 5, kind: input, shape index: {}]
  %s6 = inlined_call_operand.vmem [shape: bf16[8,8,128], index: 6, kind: output, shape index: {0}]
  %s7 = inlined_call_operand.vmem [shape: f32[8,128], index: 7, kind: output, shape index: {1}]
  %8 = xla_tuple %s6, %s7
  %s9 = sld [smem:[#allocation0]]
  $region46: #{decoder_forward.2} parent=0
    _
  %s11 = ssub.s32 1, %s9
  %s12 = scalar_select 0, %s11, %s9
  $region1: #{decoder_forward.2} parent=0
    #allocation3 [shape = 'u8[196608]{0}', space=vmem, size = 0x30000, scoped, tag = 'input window, operand 3, single buffered']
    #allocation4 [shape = 's32[1]{0}', space=sflag, size = 0x4, scoped, tag = 'scoped memory for decoder_forward.2']
    %13 = vsyncpa [#allocation4], 0
    // Predicated region
    $region2: #{decoder_forward.2} parent=1 // pred_check
      _
    $region3: #{decoder_forward.2} parent=1 // pred_check_branch
      %15 = sbr.rel (0) target = $region5
    $region4: #{decoder_forward.2} parent=1 // pred_region
      _
    $region5: #{decoder_forward.2} parent=1 // pred_fallthru
      _
    // Predicated region
    $region6: #{decoder_forward.2} parent=1 // pred_check
      _
    $region7: #{decoder_forward.2} parent=1 // pred_check_branch
      %17 = sbr.rel (0) target = $region9
    $region8: #{decoder_forward.2} parent=1 // pred_region
      _
    $region9: #{decoder_forward.2} parent=1 // pred_fallthru
      _
    // Predicated region
    $region10: #{decoder_forward.2} parent=1 // pred_check
      _
    $region11: #{decoder_forward.2} parent=1 // pred_check_branch
      %19 = sbr.rel (0) target = $region13
    $region12: #{decoder_forward.2} parent=1 // pred_region
      _
    $region13: #{decoder_forward.2} parent=1 // pred_fallthru
      _
    // Predicated region
    $region14: #{decoder_forward.2} parent=1 // pred_check
      _
    $region15: #{decoder_forward.2} parent=1 // pred_check_branch
      %21 = sbr.rel (0) target = $region17
    $region16: #{decoder_forward.2} parent=1 // pred_region
      %23 = vsyncadd [#allocation4], 0
      %s24 = sshll.u32 %s3, 4
      %s25 = int_to_ptr.hbm [resolvable:$true] %s24
      %s26 = sshll.u32 [#allocation3], 4
      %s27 = int_to_ptr.vmem [resolvable:$true] %s26
      %32 = dma.hbm_to_vmem [thread:$0]  %s25, 6144, %s27, [#allocation4], 384, 384, 24
    $region17: #{decoder_forward.2} parent=1 // pred_fallthru
      _
    // Predicated region
    $region18: #{decoder_forward.2} parent=1 // pred_check
      _
    $region19: #{decoder_forward.2} parent=1 // pred_check_branch
      %34 = sbr.rel (0) target = $region21
    $region20: #{decoder_forward.2} parent=1 // pred_region
      _
    $region21: #{decoder_forward.2} parent=1 // pred_fallthru
      _
    // Predicated region
    $region22: #{decoder_forward.2} parent=1 // pred_check
      _
    $region23: #{decoder_forward.2} parent=1 // pred_check_branch
      %36 = sbr.rel (0) target = $region25
    $region24: #{decoder_forward.2} parent=1 // pred_region
      _
    $region25: #{decoder_forward.2} parent=1 // pred_fallthru
      _
    // Predicated region
    $region26: #{decoder_forward.2} parent=1 // pred_check
      _
    $region27: #{decoder_forward.2} parent=1 // pred_check_branch
      %38 = sbr.rel (0) target = $region29
    $region28: #{decoder_forward.2} parent=1 // pred_region
      %40 = dma.done [#allocation4], 6144
    $region29: #{decoder_forward.2} parent=1 // pred_fallthru
      _
    %v41 = vld [vmem:[%s0] sm:$0xf]
    %v42 = vld [vmem:[%s0 + $0x4] sm:$0xf]
    %v43 = vld [vmem:[%s0 + $0x8] sm:$0xf]
    %v44 = vld [vmem:[%s0 + $0xc] sm:$0xf]
    %v45 = vld [vmem:[%s0 + $0x10] sm:$0xf]
    %v46 = vld [vmem:[%s0 + $0x14] sm:$0xf]
    %v47 = vld [vmem:[%s0 + $0x18] sm:$0xf]
    %v48 = vld [vmem:[%s0 + $0x1c] sm:$0xf]
    %v49 = vld [vmem:[%s2] sm:$0xff]
    %v50 = vld [vmem:[%s2 + $0x8] sm:$0xf]
    %v51 = vld [vmem:[%s2 + $0xc] sm:$0xff]
    %v52 = vld [vmem:[%s2 + $0x14] sm:$0xf]
    %v53 = vld [vmem:[%s2 + $0x18] sm:$0xff]
    %v54 = vld [vmem:[%s2 + $0x20] sm:$0xf]
    %v55 = vld [vmem:[%s2 + $0x24] sm:$0xff]
    %v56 = vld [vmem:[%s2 + $0x2c] sm:$0xf]
    %v57 = vld [vmem:[%s2 + $0x30] sm:$0xff]
    %v58 = vld [vmem:[%s2 + $0x38] sm:$0xf]
    %v59 = vld [vmem:[%s2 + $0x3c] sm:$0xff]
    %v60 = vld [vmem:[%s2 + $0x44] sm:$0xf]
    %v61 = vld [vmem:[%s2 + $0x48] sm:$0xff]
    %v62 = vld [vmem:[%s2 + $0x50] sm:$0xf]
    %v63 = vld [vmem:[%s2 + $0x54] sm:$0xff]
    %v64 = vld [vmem:[%s2 + $0x5c] sm:$0xf]
    %v65 = vld [vmem:[%s2 + $0x60] sm:$0xff]
    %v66 = vld [vmem:[%s2 + $0x68] sm:$0xf]
    %v67 = vld [vmem:[%s2 + $0x6c] sm:$0xff]
    %v68 = vld [vmem:[%s2 + $0x74] sm:$0xf]
    %v69 = vld [vmem:[%s2 + $0x78] sm:$0xff]
    %v70 = vld [vmem:[%s2 + $0x80] sm:$0xf]
    %v71 = vld [vmem:[%s2 + $0x84] sm:$0xff]
    %v72 = vld [vmem:[%s2 + $0x8c] sm:$0xf]
    %v73 = vld [vmem:[%s2 + $0x90] sm:$0xff]
    %v74 = vld [vmem:[%s2 + $0x98] sm:$0xf]
    %v75 = vld [vmem:[%s2 + $0x9c] sm:$0xff]
    %v76 = vld [vmem:[%s2 + $0xa4] sm:$0xf]
    %v77 = vld [vmem:[%s2 + $0xa8] sm:$0xff]
    %v78 = vld [vmem:[%s2 + $0xb0] sm:$0xf]
    %v79 = vld [vmem:[%s2 + $0xb4] sm:$0xff]
    %v80 = vld [vmem:[%s2 + $0xbc] sm:$0xf]
    %v81 = vld [vmem:[%s4] sm:$0x7]
    %v83 = vperm.slane %v81, 0
    %v84 = vperm.slane %v81, 1
    %v85 = vperm.slane %v81, 2
    %v97 = vunpack.c.l.b16 %v41
    %v98 = vunpack.c.l.b16 %v42
    %v99 = vunpack.c.l.b16 %v43
    %v100 = vunpack.c.l.b16 %v44
    %v101 = vunpack.c.l.b16 %v45
    %v102 = vunpack.c.l.b16 %v46
    %v103 = vunpack.c.l.b16 %v47
    %v104 = vunpack.c.l.b16 %v48
    %v105 = vpack.c.b16 %v98, %v97
    %v106 = vpack.c.b16 %v100, %v99
    %v107 = vpack.c.b16 %v102, %v101
    %v108 = vpack.c.b16 %v104, %v103
    %v145 = vunpack.c.l.b16 %v49
    %v146 = vunpack.c.h.b16 %v49
    %v147 = vunpack.c.l.b16 %v50
    %v148 = vunpack.c.l.b16 %v51
    %v149 = vunpack.c.h.b16 %v51
    %v150 = vunpack.c.l.b16 %v52
    %v151 = vunpack.c.l.b16 %v53
    %v152 = vunpack.c.h.b16 %v53
    %v153 = vunpack.c.l.b16 %v54
    %v154 = vunpack.c.l.b16 %v55
    %v155 = vunpack.c.h.b16 %v55
    %v156 = vunpack.c.l.b16 %v56
    %v157 = vunpack.c.l.b16 %v57
    %v158 = vunpack.c.h.b16 %v57
    %v159 = vunpack.c.l.b16 %v58
    %v160 = vunpack.c.l.b16 %v59
    %v161 = vunpack.c.h.b16 %v59
    %v162 = vunpack.c.l.b16 %v60
    %v163 = vunpack.c.l.b16 %v61
    %v164 = vunpack.c.h.b16 %v61
    %v165 = vunpack.c.l.b16 %v62
    %v166 = vunpack.c.l.b16 %v63
    %v167 = vunpack.c.h.b16 %v63
    %v168 = vunpack.c.l.b16 %v64
    %v169 = vunpack.c.l.b16 %v65
    %v170 = vunpack.c.h.b16 %v65
    %v171 = vunpack.c.l.b16 %v66
    %v172 = vunpack.c.l.b16 %v67
    %v173 = vunpack.c.h.b16 %v67
    %v174 = vunpack.c.l.b16 %v68
    %v175 = vunpack.c.l.b16 %v69
    %v176 = vunpack.c.h.b16 %v69
    %v177 = vunpack.c.l.b16 %v70
    %v178 = vunpack.c.l.b16 %v71
    %v179 = vunpack.c.h.b16 %v71
    %v180 = vunpack.c.l.b16 %v72
    %v181 = vunpack.c.l.b16 %v73
    %v182 = vunpack.c.h.b16 %v73
    %v183 = vunpack.c.l.b16 %v74
    %v184 = vunpack.c.l.b16 %v75
    %v185 = vunpack.c.h.b16 %v75
    %v186 = vunpack.c.l.b16 %v76
    %v187 = vunpack.c.l.b16 %v77
    %v188 = vunpack.c.h.b16 %v77
    %v189 = vunpack.c.l.b16 %v78
    %v190 = vunpack.c.l.b16 %v79
    %v191 = vunpack.c.h.b16 %v79
    %v192 = vunpack.c.l.b16 %v80
    %v193 = vpack.c.b16 %v148, %v145
    %v194 = vpack.c.b16 %v149, %v146
    %v195 = vpack.c.b16 %v150, %v147
    %v196 = vpack.c.b16 %v154, %v151
    %v197 = vpack.c.b16 %v155, %v152
    %v198 = vpack.c.b16 %v156, %v153
    %v199 = vpack.c.b16 %v160, %v157
    %v200 = vpack.c.b16 %v161, %v158
    %v201 = vpack.c.b16 %v162, %v159
    %v202 = vpack.c.b16 %v166, %v163
    %v203 = vpack.c.b16 %v167, %v164
    %v204 = vpack.c.b16 %v168, %v165
    %v205 = vpack.c.b16 %v172, %v169
    %v206 = vpack.c.b16 %v173, %v170
    %v207 = vpack.c.b16 %v174, %v171
    %v208 = vpack.c.b16 %v178, %v175
    %v209 = vpack.c.b16 %v179, %v176
    %v210 = vpack.c.b16 %v180, %v177
    %v211 = vpack.c.b16 %v184, %v181
    %v212 = vpack.c.b16 %v185, %v182
    %v213 = vpack.c.b16 %v186, %v183
    %v214 = vpack.c.b16 %v190, %v187
    %v215 = vpack.c.b16 %v191, %v188
    %v216 = vpack.c.b16 %v192, %v189
    %241 = vmatpush.bf16.msra.mxu0 %v214
    %242 = vmatpush.bf16.msra.mxu0 %v211
    %243 = vmatpush.bf16.msra.mxu0 %v208
    %244 = vmatpush.bf16.msra.mxu0 %v205
    %245 = vmatpush.bf16.msra.mxu0 %v202
    %246 = vmatpush.bf16.msra.mxu0 %v199
    %247 = vmatpush.bf16.msra.mxu0 %v196
    %248 = vmatpush.bf16.msra.mxu0 %v193
    %249 = vmatmul.bf16.gmra.mxu0 %v105
    %v250 = vpop.f32.mrf.mxu0
    %v251 = vadd.f32 %v83, %v250
    %v252 = vpop.f32.mrf.mxu0
    %v253 = vadd.f32 %v83, %v252
    %254 = vmatmul.bf16.gmra.mxu0 %v106
    %v255 = vpop.f32.mrf.mxu0
    %v256 = vadd.f32 %v83, %v255
    %v257 = vpop.f32.mrf.mxu0
    %v258 = vadd.f32 %v83, %v257
    %259 = vmatmul.bf16.gmra.mxu0 %v107
    %v260 = vpop.f32.mrf.mxu0
    %v261 = vadd.f32 %v83, %v260
    %v262 = vpop.f32.mrf.mxu0
    %v263 = vadd.f32 %v83, %v262
    %264 = vmatmul.bf16.gmra.mxu0 %v108
    %v265 = vpop.f32.mrf.mxu0
    %v266 = vadd.f32 %v83, %v265
    %v267 = vpop.f32.mrf.mxu0
    %v268 = vadd.f32 %v83, %v267
    %269 = vdwg.mxu0
    %270 = vmatpush.bf16.msra.mxu0 %v215
    %271 = vmatpush.bf16.msra.mxu0 %v212
    %272 = vmatpush.bf16.msra.mxu0 %v209
    %273 = vmatpush.bf16.msra.mxu0 %v206
    %274 = vmatpush.bf16.msra.mxu0 %v203
    %275 = vmatpush.bf16.msra.mxu0 %v200
    %276 = vmatpush.bf16.msra.mxu0 %v197
    %277 = vmatpush.bf16.msra.mxu0 %v194
    %278 = vmatmul.bf16.gmra.mxu0 %v105
    %v279 = vpop.f32.mrf.mxu0
    %v280 = vadd.f32 %v84, %v279
    %v281 = vpop.f32.mrf.mxu0
    %v282 = vadd.f32 %v84, %v281
    %283 = vmatmul.bf16.gmra.mxu0 %v106
    %v284 = vpop.f32.mrf.mxu0
    %v285 = vadd.f32 %v84, %v284
    %v286 = vpop.f32.mrf.mxu0
    %v287 = vadd.f32 %v84, %v286
    %288 = vmatmul.bf16.gmra.mxu0 %v107
    %v289 = vpop.f32.mrf.mxu0
    %v290 = vadd.f32 %v84, %v289
    %v291 = vpop.f32.mrf.mxu0
    %v292 = vadd.f32 %v84, %v291
    %293 = vmatmul.bf16.gmra.mxu0 %v108
    %v294 = vpop.f32.mrf.mxu0
    %v295 = vadd.f32 %v84, %v294
    %v296 = vpop.f32.mrf.mxu0
    %v297 = vadd.f32 %v84, %v296
    %298 = vdwg.mxu0
    %299 = vmatpush.bf16.msra.mxu0 %v216
    %300 = vmatpush.bf16.msra.mxu0 %v213
    %301 = vmatpush.bf16.msra.mxu0 %v210
    %302 = vmatpush.bf16.msra.mxu0 %v207
    %303 = vmatpush.bf16.msra.mxu0 %v204
    %304 = vmatpush.bf16.msra.mxu0 %v201
    %305 = vmatpush.bf16.msra.mxu0 %v198
    %306 = vmatpush.bf16.msra.mxu0 %v195
    %307 = vmatmul.bf16.gmra.mxu0 %v105
    %v308 = vpop.f32.mrf.mxu0
    %v309 = vadd.f32 %v85, %v308
    %v310 = vpop.f32.mrf.mxu0
    %v311 = vadd.f32 %v85, %v310
    %312 = vmatmul.bf16.gmra.mxu0 %v106
    %v313 = vpop.f32.mrf.mxu0
    %v314 = vadd.f32 %v85, %v313
    %v315 = vpop.f32.mrf.mxu0
    %v316 = vadd.f32 %v85, %v315
    %317 = vmatmul.bf16.gmra.mxu0 %v107
    %v318 = vpop.f32.mrf.mxu0
    %v319 = vadd.f32 %v85, %v318
    %v320 = vpop.f32.mrf.mxu0
    %v321 = vadd.f32 %v85, %v320
    %322 = vmatmul.bf16.gmra.mxu0 %v108
    %v323 = vpop.f32.mrf.mxu0
    %v324 = vadd.f32 %v85, %v323
    %v325 = vpop.f32.mrf.mxu0
    %v326 = vadd.f32 %v85, %v325
    %327 = vdwg.mxu0
    %328 = vst [vmem:[#allocation2] sm:$0xff] %v251
    %329 = vst [vmem:[#allocation2 + $0x8] sm:$0xff] %v280
    %330 = vst [vmem:[#allocation2 + $0x10] sm:$0xff] %v309
    %331 = vst [vmem:[#allocation2 + $0x18] sm:$0xff] %v253
    %332 = vst [vmem:[#allocation2 + $0x20] sm:$0xff] %v282
    %333 = vst [vmem:[#allocation2 + $0x28] sm:$0xff] %v311
    %334 = vst [vmem:[#allocation2 + $0x30] sm:$0xff] %v256
    %335 = vst [vmem:[#allocation2 + $0x38] sm:$0xff] %v285
    %336 = vst [vmem:[#allocation2 + $0x40] sm:$0xff] %v314
    %337 = vst [vmem:[#allocation2 + $0x48] sm:$0xff] %v258
    %338 = vst [vmem:[#allocation2 + $0x50] sm:$0xff] %v287
    %339 = vst [vmem:[#allocation2 + $0x58] sm:$0xff] %v316
    %340 = vst [vmem:[#allocation2 + $0x60] sm:$0xff] %v261
    %341 = vst [vmem:[#allocation2 + $0x68] sm:$0xff] %v290
    %342 = vst [vmem:[#allocation2 + $0x70] sm:$0xff] %v319
    %343 = vst [vmem:[#allocation2 + $0x78] sm:$0xff] %v263
    %344 = vst [vmem:[#allocation2 + $0x80] sm:$0xff] %v292
    %345 = vst [vmem:[#allocation2 + $0x88] sm:$0xff] %v321
    %346 = vst [vmem:[#allocation2 + $0x90] sm:$0xff] %v266
    %347 = vst [vmem:[#allocation2 + $0x98] sm:$0xff] %v295
    %348 = vst [vmem:[#allocation2 + $0xa0] sm:$0xff] %v324
    %349 = vst [vmem:[#allocation2 + $0xa8] sm:$0xff] %v268
    %350 = vst [vmem:[#allocation2 + $0xb0] sm:$0xff] %v297
    %351 = vst [vmem:[#allocation2 + $0xb8] sm:$0xff] %v326
    %v352 = vld [vmem:[#allocation3] sm:$0xff]
    %v353 = vld [vmem:[#allocation3 + $0x8] sm:$0xff]
    %v354 = vld [vmem:[#allocation3 + $0x10] sm:$0xff]
    %v355 = vld [vmem:[#allocation3 + $0x18] sm:$0xff]
    %v356 = vld [vmem:[#allocation3 + $0x20] sm:$0xff]
    %v357 = vld [vmem:[#allocation3 + $0x28] sm:$0xff]
    %v358 = vld [vmem:[#allocation3 + $0x30] sm:$0xff]
    %v359 = vld [vmem:[#allocation3 + $0x38] sm:$0xff]
    %v360 = vld [vmem:[#allocation3 + $0x40] sm:$0xff]
    %v361 = vld [vmem:[#allocation3 + $0x48] sm:$0xff]
    %v362 = vld [vmem:[#allocation3 + $0x50] sm:$0xff]
    %v363 = vld [vmem:[#allocation3 + $0x58] sm:$0xff]
    %v364 = vld [vmem:[#allocation3 + $0x60] sm:$0xff]
    %v365 = vld [vmem:[#allocation3 + $0x68] sm:$0xff]
    %v366 = vld [vmem:[#allocation3 + $0x70] sm:$0xff]
    %v367 = vld [vmem:[#allocation3 + $0x78] sm:$0xff]
    %v368 = vld [vmem:[#allocation3 + $0x80] sm:$0xff]
    %v369 = vld [vmem:[#allocation3 + $0x88] sm:$0xff]
    %v370 = vld [vmem:[#allocation3 + $0x90] sm:$0xff]
    %v371 = vld [vmem:[#allocation3 + $0x98] sm:$0xff]
    %v372 = vld [vmem:[#allocation3 + $0xa0] sm:$0xff]
    %v373 = vld [vmem:[#allocation3 + $0xa8] sm:$0xff]
    %v374 = vld [vmem:[#allocation3 + $0xb0] sm:$0xff]
    %v375 = vld [vmem:[#allocation3 + $0xb8] sm:$0xff]
    %v376 = vld [vmem:[#allocation3 + $0xc0] sm:$0xff]
    %v377 = vld [vmem:[#allocation3 + $0xc8] sm:$0xff]
    %v378 = vld [vmem:[#allocation3 + $0xd0] sm:$0xff]
    %v379 = vld [vmem:[#allocation3 + $0xd8] sm:$0xff]
    %v380 = vld [vmem:[#allocation3 + $0xe0] sm:$0xff]
    %v381 = vld [vmem:[#allocation3 + $0xe8] sm:$0xff]
    %v382 = vld [vmem:[#allocation3 + $0xf0] sm:$0xff]
    %v383 = vld [vmem:[#allocation3 + $0xf8] sm:$0xff]
    %v384 = vld [vmem:[#allocation3 + $0x100] sm:$0xff]
    %v385 = vld [vmem:[#allocation3 + $0x108] sm:$0xff]
    %v386 = vld [vmem:[#allocation3 + $0x110] sm:$0xff]
    %v387 = vld [vmem:[#allocation3 + $0x118] sm:$0xff]
    %v388 = vld [vmem:[#allocation3 + $0x120] sm:$0xff]
    %v389 = vld [vmem:[#allocation3 + $0x128] sm:$0xff]
    %v390 = vld [vmem:[#allocation3 + $0x130] sm:$0xff]
    %v391 = vld [vmem:[#allocation3 + $0x138] sm:$0xff]
    %v392 = vld [vmem:[#allocation3 + $0x140] sm:$0xff]
    %v393 = vld [vmem:[#allocation3 + $0x148] sm:$0xff]
    %v394 = vld [vmem:[#allocation3 + $0x150] sm:$0xff]
    %v395 = vld [vmem:[#allocation3 + $0x158] sm:$0xff]
    %v396 = vld [vmem:[#allocation3 + $0x160] sm:$0xff]
    %v397 = vld [vmem:[#allocation3 + $0x168] sm:$0xff]
    %v398 = vld [vmem:[#allocation3 + $0x170] sm:$0xff]
    %v399 = vld [vmem:[#allocation3 + $0x178] sm:$0xff]
    %v400 = vld [vmem:[%s5] sm:$0x1]
    %v402 = vperm.slane %v400, 0
    %v404 = vld [vmem:[%s1] sm:$0xff]
    %s405 = smul.u32 0, 3
    %s406 = smul.addr %s405, 8
    %s407 = scalar_lea.vmem [#allocation2], %s406
    %v408 = vld [vmem:[%s407] sm:$0xff]
    %v409 = vld [vmem:[%s407 + $0x8] sm:$0xff]
    %v410 = vld [vmem:[%s407 + $0x10] sm:$0xff]
    %411 = vmatpush.msra.mxu0 %v397
    %412 = vmatpush.msra.mxu0 %v394
    %413 = vmatpush.msra.mxu0 %v391
    %414 = vmatpush.msra.mxu0 %v388
    %415 = vmatpush.msra.mxu0 %v385
    %416 = vmatpush.msra.mxu0 %v382
    %417 = vmatpush.msra.mxu0 %v379
    %418 = vmatpush.msra.mxu0 %v376
    %419 = vmatpush.msra.mxu0 %v373
    %420 = vmatpush.msra.mxu0 %v370
    %421 = vmatpush.msra.mxu0 %v367
    %422 = vmatpush.msra.mxu0 %v364
    %423 = vmatpush.msra.mxu0 %v361
    %424 = vmatpush.msra.mxu0 %v358
    %425 = vmatpush.msra.mxu0 %v355
    %426 = vmatpush.msra.mxu0 %v352
    %427 = vmatmul.f32.gmra.mxu0 %v404
    %v428 = vpop.f32.mrf.mxu0
    %v429 = vadd.f32 0.0, %v428
    %430 = vdwg.mxu0
    %431 = vmatpush.msra.mxu0 %v398
    %432 = vmatpush.msra.mxu0 %v395
    %433 = vmatpush.msra.mxu0 %v392
    %434 = vmatpush.msra.mxu0 %v389
    %435 = vmatpush.msra.mxu0 %v386
    %436 = vmatpush.msra.mxu0 %v383
    %437 = vmatpush.msra.mxu0 %v380
    %438 = vmatpush.msra.mxu0 %v377
    %439 = vmatpush.msra.mxu0 %v374
    %440 = vmatpush.msra.mxu0 %v371
    %441 = vmatpush.msra.mxu0 %v368
    %442 = vmatpush.msra.mxu0 %v365
    %443 = vmatpush.msra.mxu0 %v362
    %444 = vmatpush.msra.mxu0 %v359
    %445 = vmatpush.msra.mxu0 %v356
    %446 = vmatpush.msra.mxu0 %v353
    %447 = vmatmul.f32.gmra.mxu0 %v404
    %v448 = vpop.f32.mrf.mxu0
    %v449 = vadd.f32 0.0, %v448
    %450 = vdwg.mxu0
    %451 = vmatpush.msra.mxu0 %v399
    %452 = vmatpush.msra.mxu0 %v396
    %453 = vmatpush.msra.mxu0 %v393
    %454 = vmatpush.msra.mxu0 %v390
    %455 = vmatpush.msra.mxu0 %v387
    %456 = vmatpush.msra.mxu0 %v384
    %457 = vmatpush.msra.mxu0 %v381
    %458 = vmatpush.msra.mxu0 %v378
    %459 = vmatpush.msra.mxu0 %v375
    %460 = vmatpush.msra.mxu0 %v372
    %461 = vmatpush.msra.mxu0 %v369
    %462 = vmatpush.msra.mxu0 %v366
    %463 = vmatpush.msra.mxu0 %v363
    %464 = vmatpush.msra.mxu0 %v360
    %465 = vmatpush.msra.mxu0 %v357
    %466 = vmatpush.msra.mxu0 %v354
    %467 = vmatmul.f32.gmra.mxu0 %v404
    %v468 = vpop.f32.mrf.mxu0
    %v469 = vadd.f32 0.0, %v468
    %470 = vdwg.mxu0
    %v471 = vadd.f32 %v408, %v429
    %v472 = vxor.u32 %v471, 2147483648
    %v473 = vmul.f32 %v472, 1.442695
    %v474 = vpow.pop %v473
    %v475 = vadd.f32 %v474, 1.0
    %v476 = vrcp.pop %v475
    %v477 = vmul.f32 %v475, %v476
    %v478 = vsub.f32 1.0, %v477
    %v479 = vmul.f32 %v476, %v478
    %v480 = vadd.f32 %v476, %v479
    %vm481 = vweird.f32 %v475
    %vm482 = vweird.f32 %v476
    %vm483 = vmor %vm481, %vm482
    %v484 = vsel %vm483, %v476, %v480
    %v485 = vand.u32 2147483647, %v475
    %vm486 = vcmp.eq.f32.partialorder %v485, 8.507059e+37
    %v487 = vand.u32 %v475, 2147483648
    %v488 = vor.u32 1.1754944e-38, %v487
    %v489 = vsel %vm486, %v488, %v484
    %v490 = vmul.f32 1.0, %v489
    %v491 = vadd.f32 %v409, %v449
    %v492 = vxor.u32 %v491, 2147483648
    %v493 = vmul.f32 %v492, 1.442695
    %v494 = vpow.pop %v493
    %v495 = vadd.f32 %v494, 1.0
    %v496 = vrcp.pop %v495
    %v497 = vmul.f32 %v495, %v496
    %v498 = vsub.f32 1.0, %v497
    %v499 = vmul.f32 %v496, %v498
    %v500 = vadd.f32 %v496, %v499
    %vm501 = vweird.f32 %v495
    %vm502 = vweird.f32 %v496
    %vm503 = vmor %vm501, %vm502
    %v504 = vsel %vm503, %v496, %v500
    %v505 = vand.u32 2147483647, %v495
    %vm506 = vcmp.eq.f32.partialorder %v505, 8.507059e+37
    %v507 = vand.u32 %v495, 2147483648
    %v508 = vor.u32 1.1754944e-38, %v507
    %v509 = vsel %vm506, %v508, %v504
    %v510 = vmul.f32 1.0, %v509
    %v511 = vadd.f32 %v469, %v402
    %v512 = vmul.f32 %v490, %v511
    %v513 = vadd.f32 %v410, %v512
    %v514 = vtanh.pop %v513
    %v515 = vsub.f32 1.0, %v510
    %v516 = vmul.f32 %v515, %v514
    %v517 = vmul.f32 %v510, %v404
    %v518 = vadd.f32 %v516, %v517
    %v519 = vpack.c.bf16 %v518, %v518
    %520 = vst [vmem:[%s6] sm:$0xf] %v519
    %s521 = smul.u32 1, 3
    %s522 = smul.addr %s521, 8
    %s523 = scalar_lea.vmem [#allocation2], %s522
    %v524 = vld [vmem:[%s523] sm:$0xff]
    %v525 = vld [vmem:[%s523 + $0x8] sm:$0xff]
    %v526 = vld [vmem:[%s523 + $0x10] sm:$0xff]
    %527 = vmatpush.msra.mxu0 %v397
    %528 = vmatpush.msra.mxu0 %v394
    %529 = vmatpush.msra.mxu0 %v391
    %530 = vmatpush.msra.mxu0 %v388
    %531 = vmatpush.msra.mxu0 %v385
    %532 = vmatpush.msra.mxu0 %v382
    %533 = vmatpush.msra.mxu0 %v379
    %534 = vmatpush.msra.mxu0 %v376
    %535 = vmatpush.msra.mxu0 %v373
    %536 = vmatpush.msra.mxu0 %v370
    %537 = vmatpush.msra.mxu0 %v367
    %538 = vmatpush.msra.mxu0 %v364
    %539 = vmatpush.msra.mxu0 %v361
    %540 = vmatpush.msra.mxu0 %v358
    %541 = vmatpush.msra.mxu0 %v355
    %542 = vmatpush.msra.mxu0 %v352
    %543 = vmatmul.f32.gmra.mxu0 %v518
    %v544 = vpop.f32.mrf.mxu0
    %v545 = vadd.f32 0.0, %v544
    %546 = vdwg.mxu0
    %547 = vmatpush.msra.mxu0 %v398
    %548 = vmatpush.msra.mxu0 %v395
    %549 = vmatpush.msra.mxu0 %v392
    %550 = vmatpush.msra.mxu0 %v389
    %551 = vmatpush.msra.mxu0 %v386
    %552 = vmatpush.msra.mxu0 %v383
    %553 = vmatpush.msra.mxu0 %v380
    %554 = vmatpush.msra.mxu0 %v377
    %555 = vmatpush.msra.mxu0 %v374
    %556 = vmatpush.msra.mxu0 %v371
    %557 = vmatpush.msra.mxu0 %v368
    %558 = vmatpush.msra.mxu0 %v365
    %559 = vmatpush.msra.mxu0 %v362
    %560 = vmatpush.msra.mxu0 %v359
    %561 = vmatpush.msra.mxu0 %v356
    %562 = vmatpush.msra.mxu0 %v353
    %563 = vmatmul.f32.gmra.mxu0 %v518
    %v564 = vpop.f32.mrf.mxu0
    %v565 = vadd.f32 0.0, %v564
    %566 = vdwg.mxu0
    %567 = vmatpush.msra.mxu0 %v399
    %568 = vmatpush.msra.mxu0 %v396
    %569 = vmatpush.msra.mxu0 %v393
    %570 = vmatpush.msra.mxu0 %v390
    %571 = vmatpush.msra.mxu0 %v387
    %572 = vmatpush.msra.mxu0 %v384
    %573 = vmatpush.msra.mxu0 %v381
    %574 = vmatpush.msra.mxu0 %v378
    %575 = vmatpush.msra.mxu0 %v375
    %576 = vmatpush.msra.mxu0 %v372
    %577 = vmatpush.msra.mxu0 %v369
    %578 = vmatpush.msra.mxu0 %v366
    %579 = vmatpush.msra.mxu0 %v363
    %580 = vmatpush.msra.mxu0 %v360
    %581 = vmatpush.msra.mxu0 %v357
    %582 = vmatpush.msra.mxu0 %v354
    %583 = vmatmul.f32.gmra.mxu0 %v518
    %v584 = vpop.f32.mrf.mxu0
    %v585 = vadd.f32 0.0, %v584
    %586 = vdwg.mxu0
    %v587 = vadd.f32 %v524, %v545
    %v588 = vxor.u32 %v587, 2147483648
    %v589 = vmul.f32 %v588, 1.442695
    %v590 = vpow.pop %v589
    %v591 = vadd.f32 %v590, 1.0
    %v592 = vrcp.pop %v591
    %v593 = vmul.f32 %v591, %v592
    %v594 = vsub.f32 1.0, %v593
    %v595 = vmul.f32 %v592, %v594
    %v596 = vadd.f32 %v592, %v595
    %vm597 = vweird.f32 %v591
    %vm598 = vweird.f32 %v592
    %vm599 = vmor %vm597, %vm598
    %v600 = vsel %vm599, %v592, %v596
    %v601 = vand.u32 2147483647, %v591
    %vm602 = vcmp.eq.f32.partialorder %v601, 8.507059e+37
    %v603 = vand.u32 %v591, 2147483648
    %v604 = vor.u32 1.1754944e-38, %v603
    %v605 = vsel %vm602, %v604, %v600
    %v606 = vmul.f32 1.0, %v605
    %v607 = vadd.f32 %v525, %v565
    %v608 = vxor.u32 %v607, 2147483648
    %v609 = vmul.f32 %v608, 1.442695
    %v610 = vpow.pop %v609
    %v611 = vadd.f32 %v610, 1.0
    %v612 = vrcp.pop %v611
    %v613 = vmul.f32 %v611, %v612
    %v614 = vsub.f32 1.0, %v613
    %v615 = vmul.f32 %v612, %v614
    %v616 = vadd.f32 %v612, %v615
    %vm617 = vweird.f32 %v611
    %vm618 = vweird.f32 %v612
    %vm619 = vmor %vm617, %vm618
    %v620 = vsel %vm619, %v612, %v616
    %v621 = vand.u32 2147483647, %v611
    %vm622 = vcmp.eq.f32.partialorder %v621, 8.507059e+37
    %v623 = vand.u32 %v611, 2147483648
    %v624 = vor.u32 1.1754944e-38, %v623
    %v625 = vsel %vm622, %v624, %v620
    %v626 = vmul.f32 1.0, %v625
    %v627 = vadd.f32 %v585, %v402
    %v628 = vmul.f32 %v606, %v627
    %v629 = vadd.f32 %v526, %v628
    %v630 = vtanh.pop %v629
    %v631 = vsub.f32 1.0, %v626
    %v632 = vmul.f32 %v631, %v630
    %v633 = vmul.f32 %v626, %v518
    %v634 = vadd.f32 %v632, %v633
    %v635 = vpack.c.bf16 %v634, %v634
    %s636 = scalar_lea.vmem %s6, 4
    %637 = vst [vmem:[%s636] sm:$0xf] %v635
    %s638 = smul.u32 2, 3
    %s639 = smul.addr %s638, 8
    %s640 = scalar_lea.vmem [#allocation2], %s639
    %v641 = vld [vmem:[%s640] sm:$0xff]
    %v642 = vld [vmem:[%s640 + $0x8] sm:$0xff]
    %v643 = vld [vmem:[%s640 + $0x10] sm:$0xff]
    %644 = vmatpush.msra.mxu0 %v397
    %645 = vmatpush.msra.mxu0 %v394
    %646 = vmatpush.msra.mxu0 %v391
    %647 = vmatpush.msra.mxu0 %v388
    %648 = vmatpush.msra.mxu0 %v385
    %649 = vmatpush.msra.mxu0 %v382
    %650 = vmatpush.msra.mxu0 %v379
    %651 = vmatpush.msra.mxu0 %v376
    %652 = vmatpush.msra.mxu0 %v373
    %653 = vmatpush.msra.mxu0 %v370
    %654 = vmatpush.msra.mxu0 %v367
    %655 = vmatpush.msra.mxu0 %v364
    %656 = vmatpush.msra.mxu0 %v361
    %657 = vmatpush.msra.mxu0 %v358
    %658 = vmatpush.msra.mxu0 %v355
    %659 = vmatpush.msra.mxu0 %v352
    %660 = vmatmul.f32.gmra.mxu0 %v634
    %v661 = vpop.f32.mrf.mxu0
    %v662 = vadd.f32 0.0, %v661
    %663 = vdwg.mxu0
    %664 = vmatpush.msra.mxu0 %v398
    %665 = vmatpush.msra.mxu0 %v395
    %666 = vmatpush.msra.mxu0 %v392
    %667 = vmatpush.msra.mxu0 %v389
    %668 = vmatpush.msra.mxu0 %v386
    %669 = vmatpush.msra.mxu0 %v383
    %670 = vmatpush.msra.mxu0 %v380
    %671 = vmatpush.msra.mxu0 %v377
    %672 = vmatpush.msra.mxu0 %v374
    %673 = vmatpush.msra.mxu0 %v371
    %674 = vmatpush.msra.mxu0 %v368
    %675 = vmatpush.msra.mxu0 %v365
    %676 = vmatpush.msra.mxu0 %v362
    %677 = vmatpush.msra.mxu0 %v359
    %678 = vmatpush.msra.mxu0 %v356
    %679 = vmatpush.msra.mxu0 %v353
    %680 = vmatmul.f32.gmra.mxu0 %v634
    %v681 = vpop.f32.mrf.mxu0
    %v682 = vadd.f32 0.0, %v681
    %683 = vdwg.mxu0
    %684 = vmatpush.msra.mxu0 %v399
    %685 = vmatpush.msra.mxu0 %v396
    %686 = vmatpush.msra.mxu0 %v393
    %687 = vmatpush.msra.mxu0 %v390
    %688 = vmatpush.msra.mxu0 %v387
    %689 = vmatpush.msra.mxu0 %v384
    %690 = vmatpush.msra.mxu0 %v381
    %691 = vmatpush.msra.mxu0 %v378
    %692 = vmatpush.msra.mxu0 %v375
    %693 = vmatpush.msra.mxu0 %v372
    %694 = vmatpush.msra.mxu0 %v369
    %695 = vmatpush.msra.mxu0 %v366
    %696 = vmatpush.msra.mxu0 %v363
    %697 = vmatpush.msra.mxu0 %v360
    %698 = vmatpush.msra.mxu0 %v357
    %699 = vmatpush.msra.mxu0 %v354
    %700 = vmatmul.f32.gmra.mxu0 %v634
    %v701 = vpop.f32.mrf.mxu0
    %v702 = vadd.f32 0.0, %v701
    %703 = vdwg.mxu0
    %v704 = vadd.f32 %v641, %v662
    %v705 = vxor.u32 %v704, 2147483648
    %v706 = vmul.f32 %v705, 1.442695
    %v707 = vpow.pop %v706
    %v708 = vadd.f32 %v707, 1.0
    %v709 = vrcp.pop %v708
    %v710 = vmul.f32 %v708, %v709
    %v711 = vsub.f32 1.0, %v710
    %v712 = vmul.f32 %v709, %v711
    %v713 = vadd.f32 %v709, %v712
    %vm714 = vweird.f32 %v708
    %vm715 = vweird.f32 %v709
    %vm716 = vmor %vm714, %vm715
    %v717 = vsel %vm716, %v709, %v713
    %v718 = vand.u32 2147483647, %v708
    %vm719 = vcmp.eq.f32.partialorder %v718, 8.507059e+37
    %v720 = vand.u32 %v708, 2147483648
    %v721 = vor.u32 1.1754944e-38, %v720
    %v722 = vsel %vm719, %v721, %v717
    %v723 = vmul.f32 1.0, %v722
    %v724 = vadd.f32 %v642, %v682
    %v725 = vxor.u32 %v724, 2147483648
    %v726 = vmul.f32 %v725, 1.442695
    %v727 = vpow.pop %v726
    %v728 = vadd.f32 %v727, 1.0
    %v729 = vrcp.pop %v728
    %v730 = vmul.f32 %v728, %v729
    %v731 = vsub.f32 1.0, %v730
    %v732 = vmul.f32 %v729, %v731
    %v733 = vadd.f32 %v729, %v732
    %vm734 = vweird.f32 %v728
    %vm735 = vweird.f32 %v729
    %vm736 = vmor %vm734, %vm735
    %v737 = vsel %vm736, %v729, %v733
    %v738 = vand.u32 2147483647, %v728
    %vm739 = vcmp.eq.f32.partialorder %v738, 8.507059e+37
    %v740 = vand.u32 %v728, 2147483648
    %v741 = vor.u32 1.1754944e-38, %v740
    %v742 = vsel %vm739, %v741, %v737
    %v743 = vmul.f32 1.0, %v742
    %v744 = vadd.f32 %v702, %v402
    %v745 = vmul.f32 %v723, %v744
    %v746 = vadd.f32 %v643, %v745
    %v747 = vtanh.pop %v746
    %v748 = vsub.f32 1.0, %v743
    %v749 = vmul.f32 %v748, %v747
    %v750 = vmul.f32 %v743, %v634
    %v751 = vadd.f32 %v749, %v750
    %v752 = vpack.c.bf16 %v751, %v751
    %s753 = scalar_lea.vmem %s6, 8
    %754 = vst [vmem:[%s753] sm:$0xf] %v752
    %s755 = smul.u32 3, 3
    %s756 = smul.addr %s755, 8
    %s757 = scalar_lea.vmem [#allocation2], %s756
    %v758 = vld [vmem:[%s757] sm:$0xff]
    %v759 = vld [vmem:[%s757 + $0x8] sm:$0xff]
    %v760 = vld [vmem:[%s757 + $0x10] sm:$0xff]
    %761 = vmatpush.msra.mxu0 %v397
    %762 = vmatpush.msra.mxu0 %v394
    %763 = vmatpush.msra.mxu0 %v391
    %764 = vmatpush.msra.mxu0 %v388
    %765 = vmatpush.msra.mxu0 %v385
    %766 = vmatpush.msra.mxu0 %v382
    %767 = vmatpush.msra.mxu0 %v379
    %768 = vmatpush.msra.mxu0 %v376
    %769 = vmatpush.msra.mxu0 %v373
    %770 = vmatpush.msra.mxu0 %v370
    %771 = vmatpush.msra.mxu0 %v367
    %772 = vmatpush.msra.mxu0 %v364
    %773 = vmatpush.msra.mxu0 %v361
    %774 = vmatpush.msra.mxu0 %v358
    %775 = vmatpush.msra.mxu0 %v355
    %776 = vmatpush.msra.mxu0 %v352
    %777 = vmatmul.f32.gmra.mxu0 %v751
    %v778 = vpop.f32.mrf.mxu0
    %v779 = vadd.f32 0.0, %v778
    %780 = vdwg.mxu0
    %781 = vmatpush.msra.mxu0 %v398
    %782 = vmatpush.msra.mxu0 %v395
    %783 = vmatpush.msra.mxu0 %v392
    %784 = vmatpush.msra.mxu0 %v389
    %785 = vmatpush.msra.mxu0 %v386
    %786 = vmatpush.msra.mxu0 %v383
    %787 = vmatpush.msra.mxu0 %v380
    %788 = vmatpush.msra.mxu0 %v377
    %789 = vmatpush.msra.mxu0 %v374
    %790 = vmatpush.msra.mxu0 %v371
    %791 = vmatpush.msra.mxu0 %v368
    %792 = vmatpush.msra.mxu0 %v365
    %793 = vmatpush.msra.mxu0 %v362
    %794 = vmatpush.msra.mxu0 %v359
    %795 = vmatpush.msra.mxu0 %v356
    %796 = vmatpush.msra.mxu0 %v353
    %797 = vmatmul.f32.gmra.mxu0 %v751
    %v798 = vpop.f32.mrf.mxu0
    %v799 = vadd.f32 0.0, %v798
    %800 = vdwg.mxu0
    %801 = vmatpush.msra.mxu0 %v399
    %802 = vmatpush.msra.mxu0 %v396
    %803 = vmatpush.msra.mxu0 %v393
    %804 = vmatpush.msra.mxu0 %v390
    %805 = vmatpush.msra.mxu0 %v387
    %806 = vmatpush.msra.mxu0 %v384
    %807 = vmatpush.msra.mxu0 %v381
    %808 = vmatpush.msra.mxu0 %v378
    %809 = vmatpush.msra.mxu0 %v375
    %810 = vmatpush.msra.mxu0 %v372
    %811 = vmatpush.msra.mxu0 %v369
    %812 = vmatpush.msra.mxu0 %v366
    %813 = vmatpush.msra.mxu0 %v363
    %814 = vmatpush.msra.mxu0 %v360
    %815 = vmatpush.msra.mxu0 %v357
    %816 = vmatpush.msra.mxu0 %v354
    %817 = vmatmul.f32.gmra.mxu0 %v751
    %v818 = vpop.f32.mrf.mxu0
    %v819 = vadd.f32 0.0, %v818
    %820 = vdwg.mxu0
    %v821 = vadd.f32 %v758, %v779
    %v822 = vxor.u32 %v821, 2147483648
    %v823 = vmul.f32 %v822, 1.442695
    %v824 = vpow.pop %v823
    %v825 = vadd.f32 %v824, 1.0
    %v826 = vrcp.pop %v825
    %v827 = vmul.f32 %v825, %v826
    %v828 = vsub.f32 1.0, %v827
    %v829 = vmul.f32 %v826, %v828
    %v830 = vadd.f32 %v826, %v829
    %vm831 = vweird.f32 %v825
    %vm832 = vweird.f32 %v826
    %vm833 = vmor %vm831, %vm832
    %v834 = vsel %vm833, %v826, %v830
    %v835 = vand.u32 2147483647, %v825
    %vm836 = vcmp.eq.f32.partialorder %v835, 8.507059e+37
    %v837 = vand.u32 %v825, 2147483648
    %v838 = vor.u32 1.1754944e-38, %v837
    %v839 = vsel %vm836, %v838, %v834
    %v840 = vmul.f32 1.0, %v839
    %v841 = vadd.f32 %v759, %v799
    %v842 = vxor.u32 %v841, 2147483648
    %v843 = vmul.f32 %v842, 1.442695
    %v844 = vpow.pop %v843
    %v845 = vadd.f32 %v844, 1.0
    %v846 = vrcp.pop %v845
    %v847 = vmul.f32 %v845, %v846
    %v848 = vsub.f32 1.0, %v847
    %v849 = vmul.f32 %v846, %v848
    %v850 = vadd.f32 %v846, %v849
    %vm851 = vweird.f32 %v845
    %vm852 = vweird.f32 %v846
    %vm853 = vmor %vm851, %vm852
    %v854 = vsel %vm853, %v846, %v850
    %v855 = vand.u32 2147483647, %v845
    %vm856 = vcmp.eq.f32.partialorder %v855, 8.507059e+37
    %v857 = vand.u32 %v845, 2147483648
    %v858 = vor.u32 1.1754944e-38, %v857
    %v859 = vsel %vm856, %v858, %v854
    %v860 = vmul.f32 1.0, %v859
    %v861 = vadd.f32 %v819, %v402
    %v862 = vmul.f32 %v840, %v861
    %v863 = vadd.f32 %v760, %v862
    %v864 = vtanh.pop %v863
    %v865 = vsub.f32 1.0, %v860
    %v866 = vmul.f32 %v865, %v864
    %v867 = vmul.f32 %v860, %v751
    %v868 = vadd.f32 %v866, %v867
    %v869 = vpack.c.bf16 %v868, %v868
    %s870 = scalar_lea.vmem %s6, 12
    %871 = vst [vmem:[%s870] sm:$0xf] %v869
    %s872 = smul.u32 4, 3
    %s873 = smul.addr %s872, 8
    %s874 = scalar_lea.vmem [#allocation2], %s873
    %v875 = vld [vmem:[%s874] sm:$0xff]
    %v876 = vld [vmem:[%s874 + $0x8] sm:$0xff]
    %v877 = vld [vmem:[%s874 + $0x10] sm:$0xff]
    %878 = vmatpush.msra.mxu0 %v397
    %879 = vmatpush.msra.mxu0 %v394
    %880 = vmatpush.msra.mxu0 %v391
    %881 = vmatpush.msra.mxu0 %v388
    %882 = vmatpush.msra.mxu0 %v385
    %883 = vmatpush.msra.mxu0 %v382
    %884 = vmatpush.msra.mxu0 %v379
    %885 = vmatpush.msra.mxu0 %v376
    %886 = vmatpush.msra.mxu0 %v373
    %887 = vmatpush.msra.mxu0 %v370
    %888 = vmatpush.msra.mxu0 %v367
    %889 = vmatpush.msra.mxu0 %v364
    %890 = vmatpush.msra.mxu0 %v361
    %891 = vmatpush.msra.mxu0 %v358
    %892 = vmatpush.msra.mxu0 %v355
    %893 = vmatpush.msra.mxu0 %v352
    %894 = vmatmul.f32.gmra.mxu0 %v868
    %v895 = vpop.f32.mrf.mxu0
    %v896 = vadd.f32 0.0, %v895
    %897 = vdwg.mxu0
    %898 = vmatpush.msra.mxu0 %v398
    %899 = vmatpush.msra.mxu0 %v395
    %900 = vmatpush.msra.mxu0 %v392
    %901 = vmatpush.msra.mxu0 %v389
    %902 = vmatpush.msra.mxu0 %v386
    %903 = vmatpush.msra.mxu0 %v383
    %904 = vmatpush.msra.mxu0 %v380
    %905 = vmatpush.msra.mxu0 %v377
    %906 = vmatpush.msra.mxu0 %v374
    %907 = vmatpush.msra.mxu0 %v371
    %908 = vmatpush.msra.mxu0 %v368
    %909 = vmatpush.msra.mxu0 %v365
    %910 = vmatpush.msra.mxu0 %v362
    %911 = vmatpush.msra.mxu0 %v359
    %912 = vmatpush.msra.mxu0 %v356
    %913 = vmatpush.msra.mxu0 %v353
    %914 = vmatmul.f32.gmra.mxu0 %v868
    %v915 = vpop.f32.mrf.mxu0
    %v916 = vadd.f32 0.0, %v915
    %917 = vdwg.mxu0
    %918 = vmatpush.msra.mxu0 %v399
    %919 = vmatpush.msra.mxu0 %v396
    %920 = vmatpush.msra.mxu0 %v393
    %921 = vmatpush.msra.mxu0 %v390
    %922 = vmatpush.msra.mxu0 %v387
    %923 = vmatpush.msra.mxu0 %v384
    %924 = vmatpush.msra.mxu0 %v381
    %925 = vmatpush.msra.mxu0 %v378
    %926 = vmatpush.msra.mxu0 %v375
    %927 = vmatpush.msra.mxu0 %v372
    %928 = vmatpush.msra.mxu0 %v369
    %929 = vmatpush.msra.mxu0 %v366
    %930 = vmatpush.msra.mxu0 %v363
    %931 = vmatpush.msra.mxu0 %v360
    %932 = vmatpush.msra.mxu0 %v357
    %933 = vmatpush.msra.mxu0 %v354
    %934 = vmatmul.f32.gmra.mxu0 %v868
    %v935 = vpop.f32.mrf.mxu0
    %v936 = vadd.f32 0.0, %v935
    %937 = vdwg.mxu0
    %v938 = vadd.f32 %v875, %v896
    %v939 = vxor.u32 %v938, 2147483648
    %v940 = vmul.f32 %v939, 1.442695
    %v941 = vpow.pop %v940
    %v942 = vadd.f32 %v941, 1.0
    %v943 = vrcp.pop %v942
    %v944 = vmul.f32 %v942, %v943
    %v945 = vsub.f32 1.0, %v944
    %v946 = vmul.f32 %v943, %v945
    %v947 = vadd.f32 %v943, %v946
    %vm948 = vweird.f32 %v942
    %vm949 = vweird.f32 %v943
    %vm950 = vmor %vm948, %vm949
    %v951 = vsel %vm950, %v943, %v947
    %v952 = vand.u32 2147483647, %v942
    %vm953 = vcmp.eq.f32.partialorder %v952, 8.507059e+37
    %v954 = vand.u32 %v942, 2147483648
    %v955 = vor.u32 1.1754944e-38, %v954
    %v956 = vsel %vm953, %v955, %v951
    %v957 = vmul.f32 1.0, %v956
    %v958 = vadd.f32 %v876, %v916
    %v959 = vxor.u32 %v958, 2147483648
    %v960 = vmul.f32 %v959, 1.442695
    %v961 = vpow.pop %v960
    %v962 = vadd.f32 %v961, 1.0
    %v963 = vrcp.pop %v962
    %v964 = vmul.f32 %v962, %v963
    %v965 = vsub.f32 1.0, %v964
    %v966 = vmul.f32 %v963, %v965
    %v967 = vadd.f32 %v963, %v966
    %vm968 = vweird.f32 %v962
    %vm969 = vweird.f32 %v963
    %vm970 = vmor %vm968, %vm969
    %v971 = vsel %vm970, %v963, %v967
    %v972 = vand.u32 2147483647, %v962
    %vm973 = vcmp.eq.f32.partialorder %v972, 8.507059e+37
    %v974 = vand.u32 %v962, 2147483648
    %v975 = vor.u32 1.1754944e-38, %v974
    %v976 = vsel %vm973, %v975, %v971
    %v977 = vmul.f32 1.0, %v976
    %v978 = vadd.f32 %v936, %v402
    %v979 = vmul.f32 %v957, %v978
    %v980 = vadd.f32 %v877, %v979
    %v981 = vtanh.pop %v980
    %v982 = vsub.f32 1.0, %v977
    %v983 = vmul.f32 %v982, %v981
    %v984 = vmul.f32 %v977, %v868
    %v985 = vadd.f32 %v983, %v984
    %v986 = vpack.c.bf16 %v985, %v985
    %s987 = scalar_lea.vmem %s6, 16
    %988 = vst [vmem:[%s987] sm:$0xf] %v986
    %s989 = smul.u32 5, 3
    %s990 = smul.addr %s989, 8
    %s991 = scalar_lea.vmem [#allocation2], %s990
    %v992 = vld [vmem:[%s991] sm:$0xff]
    %v993 = vld [vmem:[%s991 + $0x8] sm:$0xff]
    %v994 = vld [vmem:[%s991 + $0x10] sm:$0xff]
    %995 = vmatpush.msra.mxu0 %v397
    %996 = vmatpush.msra.mxu0 %v394
    %997 = vmatpush.msra.mxu0 %v391
    %998 = vmatpush.msra.mxu0 %v388
    %999 = vmatpush.msra.mxu0 %v385
    %1000 = vmatpush.msra.mxu0 %v382
    %1001 = vmatpush.msra.mxu0 %v379
    %1002 = vmatpush.msra.mxu0 %v376
    %1003 = vmatpush.msra.mxu0 %v373
    %1004 = vmatpush.msra.mxu0 %v370
    %1005 = vmatpush.msra.mxu0 %v367
    %1006 = vmatpush.msra.mxu0 %v364
    %1007 = vmatpush.msra.mxu0 %v361
    %1008 = vmatpush.msra.mxu0 %v358
    %1009 = vmatpush.msra.mxu0 %v355
    %1010 = vmatpush.msra.mxu0 %v352
    %1011 = vmatmul.f32.gmra.mxu0 %v985
    %v1012 = vpop.f32.mrf.mxu0
    %v1013 = vadd.f32 0.0, %v1012
    %1014 = vdwg.mxu0
    %1015 = vmatpush.msra.mxu0 %v398
    %1016 = vmatpush.msra.mxu0 %v395
    %1017 = vmatpush.msra.mxu0 %v392
    %1018 = vmatpush.msra.mxu0 %v389
    %1019 = vmatpush.msra.mxu0 %v386
    %1020 = vmatpush.msra.mxu0 %v383
    %1021 = vmatpush.msra.mxu0 %v380
    %1022 = vmatpush.msra.mxu0 %v377
    %1023 = vmatpush.msra.mxu0 %v374
    %1024 = vmatpush.msra.mxu0 %v371
    %1025 = vmatpush.msra.mxu0 %v368
    %1026 = vmatpush.msra.mxu0 %v365
    %1027 = vmatpush.msra.mxu0 %v362
    %1028 = vmatpush.msra.mxu0 %v359
    %1029 = vmatpush.msra.mxu0 %v356
    %1030 = vmatpush.msra.mxu0 %v353
    %1031 = vmatmul.f32.gmra.mxu0 %v985
    %v1032 = vpop.f32.mrf.mxu0
    %v1033 = vadd.f32 0.0, %v1032
    %1034 = vdwg.mxu0
    %1035 = vmatpush.msra.mxu0 %v399
    %1036 = vmatpush.msra.mxu0 %v396
    %1037 = vmatpush.msra.mxu0 %v393
    %1038 = vmatpush.msra.mxu0 %v390
    %1039 = vmatpush.msra.mxu0 %v387
    %1040 = vmatpush.msra.mxu0 %v384
    %1041 = vmatpush.msra.mxu0 %v381
    %1042 = vmatpush.msra.mxu0 %v378
    %1043 = vmatpush.msra.mxu0 %v375
    %1044 = vmatpush.msra.mxu0 %v372
    %1045 = vmatpush.msra.mxu0 %v369
    %1046 = vmatpush.msra.mxu0 %v366
    %1047 = vmatpush.msra.mxu0 %v363
    %1048 = vmatpush.msra.mxu0 %v360
    %1049 = vmatpush.msra.mxu0 %v357
    %1050 = vmatpush.msra.mxu0 %v354
    %1051 = vmatmul.f32.gmra.mxu0 %v985
    %v1052 = vpop.f32.mrf.mxu0
    %v1053 = vadd.f32 0.0, %v1052
    %1054 = vdwg.mxu0
    %v1055 = vadd.f32 %v992, %v1013
    %v1056 = vxor.u32 %v1055, 2147483648
    %v1057 = vmul.f32 %v1056, 1.442695
    %v1058 = vpow.pop %v1057
    %v1059 = vadd.f32 %v1058, 1.0
    %v1060 = vrcp.pop %v1059
    %v1061 = vmul.f32 %v1059, %v1060
    %v1062 = vsub.f32 1.0, %v1061
    %v1063 = vmul.f32 %v1060, %v1062
    %v1064 = vadd.f32 %v1060, %v1063
    %vm1065 = vweird.f32 %v1059
    %vm1066 = vweird.f32 %v1060
    %vm1067 = vmor %vm1065, %vm1066
    %v1068 = vsel %vm1067, %v1060, %v1064
    %v1069 = vand.u32 2147483647, %v1059
    %vm1070 = vcmp.eq.f32.partialorder %v1069, 8.507059e+37
    %v1071 = vand.u32 %v1059, 2147483648
    %v1072 = vor.u32 1.1754944e-38, %v1071
    %v1073 = vsel %vm1070, %v1072, %v1068
    %v1074 = vmul.f32 1.0, %v1073
    %v1075 = vadd.f32 %v993, %v1033
    %v1076 = vxor.u32 %v1075, 2147483648
    %v1077 = vmul.f32 %v1076, 1.442695
    %v1078 = vpow.pop %v1077
    %v1079 = vadd.f32 %v1078, 1.0
    %v1080 = vrcp.pop %v1079
    %v1081 = vmul.f32 %v1079, %v1080
    %v1082 = vsub.f32 1.0, %v1081
    %v1083 = vmul.f32 %v1080, %v1082
    %v1084 = vadd.f32 %v1080, %v1083
    %vm1085 = vweird.f32 %v1079
    %vm1086 = vweird.f32 %v1080
    %vm1087 = vmor %vm1085, %vm1086
    %v1088 = vsel %vm1087, %v1080, %v1084
    %v1089 = vand.u32 2147483647, %v1079
    %vm1090 = vcmp.eq.f32.partialorder %v1089, 8.507059e+37
    %v1091 = vand.u32 %v1079, 2147483648
    %v1092 = vor.u32 1.1754944e-38, %v1091
    %v1093 = vsel %vm1090, %v1092, %v1088
    %v1094 = vmul.f32 1.0, %v1093
    %v1095 = vadd.f32 %v1053, %v402
    %v1096 = vmul.f32 %v1074, %v1095
    %v1097 = vadd.f32 %v994, %v1096
    %v1098 = vtanh.pop %v1097
    %v1099 = vsub.f32 1.0, %v1094
    %v1100 = vmul.f32 %v1099, %v1098
    %v1101 = vmul.f32 %v1094, %v985
    %v1102 = vadd.f32 %v1100, %v1101
    %v1103 = vpack.c.bf16 %v1102, %v1102
    %s1104 = scalar_lea.vmem %s6, 20
    %1105 = vst [vmem:[%s1104] sm:$0xf] %v1103
    %s1106 = smul.u32 6, 3
    %s1107 = smul.addr %s1106, 8
    %s1108 = scalar_lea.vmem [#allocation2], %s1107
    %v1109 = vld [vmem:[%s1108] sm:$0xff]
    %v1110 = vld [vmem:[%s1108 + $0x8] sm:$0xff]
    %v1111 = vld [vmem:[%s1108 + $0x10] sm:$0xff]
    %1112 = vmatpush.msra.mxu0 %v397
    %1113 = vmatpush.msra.mxu0 %v394
    %1114 = vmatpush.msra.mxu0 %v391
    %1115 = vmatpush.msra.mxu0 %v388
    %1116 = vmatpush.msra.mxu0 %v385
    %1117 = vmatpush.msra.mxu0 %v382
    %1118 = vmatpush.msra.mxu0 %v379
    %1119 = vmatpush.msra.mxu0 %v376
    %1120 = vmatpush.msra.mxu0 %v373
    %1121 = vmatpush.msra.mxu0 %v370
    %1122 = vmatpush.msra.mxu0 %v367
    %1123 = vmatpush.msra.mxu0 %v364
    %1124 = vmatpush.msra.mxu0 %v361
    %1125 = vmatpush.msra.mxu0 %v358
    %1126 = vmatpush.msra.mxu0 %v355
    %1127 = vmatpush.msra.mxu0 %v352
    %1128 = vmatmul.f32.gmra.mxu0 %v1102
    %v1129 = vpop.f32.mrf.mxu0
    %v1130 = vadd.f32 0.0, %v1129
    %1131 = vdwg.mxu0
    %1132 = vmatpush.msra.mxu0 %v398
    %1133 = vmatpush.msra.mxu0 %v395
    %1134 = vmatpush.msra.mxu0 %v392
    %1135 = vmatpush.msra.mxu0 %v389
    %1136 = vmatpush.msra.mxu0 %v386
    %1137 = vmatpush.msra.mxu0 %v383
    %1138 = vmatpush.msra.mxu0 %v380
    %1139 = vmatpush.msra.mxu0 %v377
    %1140 = vmatpush.msra.mxu0 %v374
    %1141 = vmatpush.msra.mxu0 %v371
    %1142 = vmatpush.msra.mxu0 %v368
    %1143 = vmatpush.msra.mxu0 %v365
    %1144 = vmatpush.msra.mxu0 %v362
    %1145 = vmatpush.msra.mxu0 %v359
    %1146 = vmatpush.msra.mxu0 %v356
    %1147 = vmatpush.msra.mxu0 %v353
    %1148 = vmatmul.f32.gmra.mxu0 %v1102
    %v1149 = vpop.f32.mrf.mxu0
    %v1150 = vadd.f32 0.0, %v1149
    %1151 = vdwg.mxu0
    %1152 = vmatpush.msra.mxu0 %v399
    %1153 = vmatpush.msra.mxu0 %v396
    %1154 = vmatpush.msra.mxu0 %v393
    %1155 = vmatpush.msra.mxu0 %v390
    %1156 = vmatpush.msra.mxu0 %v387
    %1157 = vmatpush.msra.mxu0 %v384
    %1158 = vmatpush.msra.mxu0 %v381
    %1159 = vmatpush.msra.mxu0 %v378
    %1160 = vmatpush.msra.mxu0 %v375
    %1161 = vmatpush.msra.mxu0 %v372
    %1162 = vmatpush.msra.mxu0 %v369
    %1163 = vmatpush.msra.mxu0 %v366
    %1164 = vmatpush.msra.mxu0 %v363
    %1165 = vmatpush.msra.mxu0 %v360
    %1166 = vmatpush.msra.mxu0 %v357
    %1167 = vmatpush.msra.mxu0 %v354
    %1168 = vmatmul.f32.gmra.mxu0 %v1102
    %v1169 = vpop.f32.mrf.mxu0
    %v1170 = vadd.f32 0.0, %v1169
    %1171 = vdwg.mxu0
    %v1172 = vadd.f32 %v1109, %v1130
    %v1173 = vxor.u32 %v1172, 2147483648
    %v1174 = vmul.f32 %v1173, 1.442695
    %v1175 = vpow.pop %v1174
    %v1176 = vadd.f32 %v1175, 1.0
    %v1177 = vrcp.pop %v1176
    %v1178 = vmul.f32 %v1176, %v1177
    %v1179 = vsub.f32 1.0, %v1178
    %v1180 = vmul.f32 %v1177, %v1179
    %v1181 = vadd.f32 %v1177, %v1180
    %vm1182 = vweird.f32 %v1176
    %vm1183 = vweird.f32 %v1177
    %vm1184 = vmor %vm1182, %vm1183
    %v1185 = vsel %vm1184, %v1177, %v1181
    %v1186 = vand.u32 2147483647, %v1176
    %vm1187 = vcmp.eq.f32.partialorder %v1186, 8.507059e+37
    %v1188 = vand.u32 %v1176, 2147483648
    %v1189 = vor.u32 1.1754944e-38, %v1188
    %v1190 = vsel %vm1187, %v1189, %v1185
    %v1191 = vmul.f32 1.0, %v1190
    %v1192 = vadd.f32 %v1110, %v1150
    %v1193 = vxor.u32 %v1192, 2147483648
    %v1194 = vmul.f32 %v1193, 1.442695
    %v1195 = vpow.pop %v1194
    %v1196 = vadd.f32 %v1195, 1.0
    %v1197 = vrcp.pop %v1196
    %v1198 = vmul.f32 %v1196, %v1197
    %v1199 = vsub.f32 1.0, %v1198
    %v1200 = vmul.f32 %v1197, %v1199
    %v1201 = vadd.f32 %v1197, %v1200
    %vm1202 = vweird.f32 %v1196
    %vm1203 = vweird.f32 %v1197
    %vm1204 = vmor %vm1202, %vm1203
    %v1205 = vsel %vm1204, %v1197, %v1201
    %v1206 = vand.u32 2147483647, %v1196
    %vm1207 = vcmp.eq.f32.partialorder %v1206, 8.507059e+37
    %v1208 = vand.u32 %v1196, 2147483648
    %v1209 = vor.u32 1.1754944e-38, %v1208
    %v1210 = vsel %vm1207, %v1209, %v1205
    %v1211 = vmul.f32 1.0, %v1210
    %v1212 = vadd.f32 %v1170, %v402
    %v1213 = vmul.f32 %v1191, %v1212
    %v1214 = vadd.f32 %v1111, %v1213
    %v1215 = vtanh.pop %v1214
    %v1216 = vsub.f32 1.0, %v1211
    %v1217 = vmul.f32 %v1216, %v1215
    %v1218 = vmul.f32 %v1211, %v1102
    %v1219 = vadd.f32 %v1217, %v1218
    %v1220 = vpack.c.bf16 %v1219, %v1219
    %s1221 = scalar_lea.vmem %s6, 24
    %1222 = vst [vmem:[%s1221] sm:$0xf] %v1220
    %s1223 = smul.u32 7, 3
    %s1224 = smul.addr %s1223, 8
    %s1225 = scalar_lea.vmem [#allocation2], %s1224
    %v1226 = vld [vmem:[%s1225] sm:$0xff]
    %v1227 = vld [vmem:[%s1225 + $0x8] sm:$0xff]
    %v1228 = vld [vmem:[%s1225 + $0x10] sm:$0xff]
    %1229 = vmatpush.msra.mxu0 %v397
    %1230 = vmatpush.msra.mxu0 %v394
    %1231 = vmatpush.msra.mxu0 %v391
    %1232 = vmatpush.msra.mxu0 %v388
    %1233 = vmatpush.msra.mxu0 %v385
    %1234 = vmatpush.msra.mxu0 %v382
    %1235 = vmatpush.msra.mxu0 %v379
    %1236 = vmatpush.msra.mxu0 %v376
    %1237 = vmatpush.msra.mxu0 %v373
    %1238 = vmatpush.msra.mxu0 %v370
    %1239 = vmatpush.msra.mxu0 %v367
    %1240 = vmatpush.msra.mxu0 %v364
    %1241 = vmatpush.msra.mxu0 %v361
    %1242 = vmatpush.msra.mxu0 %v358
    %1243 = vmatpush.msra.mxu0 %v355
    %1244 = vmatpush.msra.mxu0 %v352
    %1245 = vmatmul.f32.gmra.mxu0 %v1219
    %v1246 = vpop.f32.mrf.mxu0
    %v1247 = vadd.f32 0.0, %v1246
    %1248 = vdwg.mxu0
    %1249 = vmatpush.msra.mxu0 %v398
    %1250 = vmatpush.msra.mxu0 %v395
    %1251 = vmatpush.msra.mxu0 %v392
    %1252 = vmatpush.msra.mxu0 %v389
    %1253 = vmatpush.msra.mxu0 %v386
    %1254 = vmatpush.msra.mxu0 %v383
    %1255 = vmatpush.msra.mxu0 %v380
    %1256 = vmatpush.msra.mxu0 %v377
    %1257 = vmatpush.msra.mxu0 %v374
    %1258 = vmatpush.msra.mxu0 %v371
    %1259 = vmatpush.msra.mxu0 %v368
    %1260 = vmatpush.msra.mxu0 %v365
    %1261 = vmatpush.msra.mxu0 %v362
    %1262 = vmatpush.msra.mxu0 %v359
    %1263 = vmatpush.msra.mxu0 %v356
    %1264 = vmatpush.msra.mxu0 %v353
    %1265 = vmatmul.f32.gmra.mxu0 %v1219
    %v1266 = vpop.f32.mrf.mxu0
    %v1267 = vadd.f32 0.0, %v1266
    %1268 = vdwg.mxu0
    %1269 = vmatpush.msra.mxu0 %v399
    %1270 = vmatpush.msra.mxu0 %v396
    %1271 = vmatpush.msra.mxu0 %v393
    %1272 = vmatpush.msra.mxu0 %v390
    %1273 = vmatpush.msra.mxu0 %v387
    %1274 = vmatpush.msra.mxu0 %v384
    %1275 = vmatpush.msra.mxu0 %v381
    %1276 = vmatpush.msra.mxu0 %v378
    %1277 = vmatpush.msra.mxu0 %v375
    %1278 = vmatpush.msra.mxu0 %v372
    %1279 = vmatpush.msra.mxu0 %v369
    %1280 = vmatpush.msra.mxu0 %v366
    %1281 = vmatpush.msra.mxu0 %v363
    %1282 = vmatpush.msra.mxu0 %v360
    %1283 = vmatpush.msra.mxu0 %v357
    %1284 = vmatpush.msra.mxu0 %v354
    %1285 = vmatmul.f32.gmra.mxu0 %v1219
    %v1286 = vpop.f32.mrf.mxu0
    %v1287 = vadd.f32 0.0, %v1286
    %1288 = vdwg.mxu0
    %v1289 = vadd.f32 %v1226, %v1247
    %v1290 = vxor.u32 %v1289, 2147483648
    %v1291 = vmul.f32 %v1290, 1.442695
    %v1292 = vpow.pop %v1291
    %v1293 = vadd.f32 %v1292, 1.0
    %v1294 = vrcp.pop %v1293
    %v1295 = vmul.f32 %v1293, %v1294
    %v1296 = vsub.f32 1.0, %v1295
    %v1297 = vmul.f32 %v1294, %v1296
    %v1298 = vadd.f32 %v1294, %v1297
    %vm1299 = vweird.f32 %v1293
    %vm1300 = vweird.f32 %v1294
    %vm1301 = vmor %vm1299, %vm1300
    %v1302 = vsel %vm1301, %v1294, %v1298
    %v1303 = vand.u32 2147483647, %v1293
    %vm1304 = vcmp.eq.f32.partialorder %v1303, 8.507059e+37
    %v1305 = vand.u32 %v1293, 2147483648
    %v1306 = vor.u32 1.1754944e-38, %v1305
    %v1307 = vsel %vm1304, %v1306, %v1302
    %v1308 = vmul.f32 1.0, %v1307
    %v1309 = vadd.f32 %v1227, %v1267
    %v1310 = vxor.u32 %v1309, 2147483648
    %v1311 = vmul.f32 %v1310, 1.442695
    %v1312 = vpow.pop %v1311
    %v1313 = vadd.f32 %v1312, 1.0
    %v1314 = vrcp.pop %v1313
    %v1315 = vmul.f32 %v1313, %v1314
    %v1316 = vsub.f32 1.0, %v1315
    %v1317 = vmul.f32 %v1314, %v1316
    %v1318 = vadd.f32 %v1314, %v1317
    %vm1319 = vweird.f32 %v1313
    %vm1320 = vweird.f32 %v1314
    %vm1321 = vmor %vm1319, %vm1320
    %v1322 = vsel %vm1321, %v1314, %v1318
    %v1323 = vand.u32 2147483647, %v1313
    %vm1324 = vcmp.eq.f32.partialorder %v1323, 8.507059e+37
    %v1325 = vand.u32 %v1313, 2147483648
    %v1326 = vor.u32 1.1754944e-38, %v1325
    %v1327 = vsel %vm1324, %v1326, %v1322
    %v1328 = vmul.f32 1.0, %v1327
    %v1329 = vadd.f32 %v1287, %v402
    %v1330 = vmul.f32 %v1308, %v1329
    %v1331 = vadd.f32 %v1228, %v1330
    %v1332 = vtanh.pop %v1331
    %v1333 = vsub.f32 1.0, %v1328
    %v1334 = vmul.f32 %v1333, %v1332
    %v1335 = vmul.f32 %v1328, %v1219
    %v1336 = vadd.f32 %v1334, %v1335
    %v1337 = vpack.c.bf16 %v1336, %v1336
    %s1338 = scalar_lea.vmem %s6, 28
    %1339 = vst [vmem:[%s1338] sm:$0xf] %v1337
    %1340 = vst [vmem:[%s7] sm:$0xff] %v1336
    // Predicated region
    $region30: #{decoder_forward.2} parent=1 // pred_check
      _
    $region31: #{decoder_forward.2} parent=1 // pred_check_branch
      %1342 = sbr.rel (0) target = $region33
    $region32: #{decoder_forward.2} parent=1 // pred_region
      _
    $region33: #{decoder_forward.2} parent=1 // pred_fallthru
      _
    // Predicated region
    $region34: #{decoder_forward.2} parent=1 // pred_check
      _
    $region35: #{decoder_forward.2} parent=1 // pred_check_branch
      %1344 = sbr.rel (0) target = $region37
    $region36: #{decoder_forward.2} parent=1 // pred_region
      _
    $region37: #{decoder_forward.2} parent=1 // pred_fallthru
      _
    // Predicated region
    $region38: #{decoder_forward.2} parent=1 // pred_check
      _
    $region39: #{decoder_forward.2} parent=1 // pred_check_branch
      %1346 = sbr.rel (0) target = $region41
    $region40: #{decoder_forward.2} parent=1 // pred_region
      _
    $region41: #{decoder_forward.2} parent=1 // pred_fallthru
      _
    // Predicated region
    $region42: #{decoder_forward.2} parent=1 // pred_check
      _
    $region43: #{decoder_forward.2} parent=1 // pred_check_branch
      %1348 = sbr.rel (0) target = $region45
    $region44: #{decoder_forward.2} parent=1 // pred_region
      _
    $region45: #{decoder_forward.2} parent=1 // pred_fallthru
      _
    %1349 = vsyncpa [#allocation4], 1

</llo_original>
